<compile_context>
chip_gen: v6e
topology: v6e:2x2x1
jax: 0.10.0
libtpu: 0.0.40
codegen_flags: <defaults>
</compile_context>

<pallas_src>
import jax
import jax.numpy as jnp
from jax import lax
from jax.experimental import pallas as pl
from jax.experimental.pallas import tpu as pltpu


# ------------------------------- Pallas kernel -------------------------------

def unet_inner_kernel(xr_ref, wd_ref, wu_ref, bias_ref, o_ref, hbuf):
    # xr_ref:   (Nb, Hh, Wh, 4*Ci) f32 phase-split, zero-padded input:
    #                                xr[n, i, j, (2r+c)*Ci + ci] = xpad[n, 2i+r, 2j+c, ci]
    # wd_ref:   (16*Ci, Cm) bf16    down Conv2d(4,4,s2,p1) weights, im2col layout
    # wu_ref:   (2, 2, 4*Cm, Co) bf16  ConvT(4,4,s2,p1) weights per out-parity, BN scale folded
    # bias_ref: (1, Co) f32         folded BatchNorm2d (eval) bias
    # o_ref:    (Nb, 4, Hd, Wd, Co) parity-major conv-branch output (p = 2a + b)
    # hbuf:     (Nb, Hd+2, Wd+2, Cm) bf16 VMEM scratch (zero halo for ConvT padding=1)
    Nb, Hh, Wh, Ci4 = xr_ref.shape
    Cm = wd_ref.shape[1]
    Co = wu_ref.shape[3]
    Hd, Wd = Hh - 1, Wh - 1
    M = Nb * Hd * Wd

    # ---- down: LeakyReLU(0.2) -> Conv2d(4,4,s2,p1) as ONE im2col matmul -> ReLU ----
    xv = xr_ref[...]
    xv = jnp.where(xv > 0, xv, 0.2 * xv)            # f32 epilogue (v5e-safe); leaky(0)=0 pad-safe
    xv = xv.astype(jnp.bfloat16)                     # bf16 MXU operands, f32 accumulation
    taps = [xv[:, di:di + Hd, dj:dj + Wd, :].reshape(M, Ci4)
            for di in (0, 1) for dj in (0, 1)]       # 4 contiguous tap-groups (phases in lanes)
    patch = jnp.concatenate(taps, axis=-1)           # (M, 16*Ci)
    h = jnp.dot(patch, wd_ref[...], preferred_element_type=jnp.float32)
    h = jnp.maximum(h, 0.0)                          # uprelu fused (f32)

    # ---- ConvTranspose padding=1: zero only the 1-wide halo of the VMEM scratch ----
    zrow = jnp.zeros((Nb, 1, Wd + 2, Cm), hbuf.dtype)
    zcol = jnp.zeros((Nb, Hd + 2, 1, Cm), hbuf.dtype)
    hbuf[:, 0:1, :, :] = zrow
    hbuf[:, Hd + 1:Hd + 2, :, :] = zrow
    hbuf[:, :, 0:1, :] = zcol
    hbuf[:, :, Wd + 1:Wd + 2, :] = zcol
    hbuf[:, 1:Hd + 1, 1:Wd + 1, :] = h.reshape(Nb, Hd, Wd, Cm).astype(hbuf.dtype)

    # ---- up: ConvTranspose2d(4,4,s2,p1) as 4 output-parity matmuls; BN scale is in
    #      the weights, only the bias is added; each parity stored to its own slice ----
    bias = bias_ref[0]
    STARTS = ((1, 0), (2, 1))                        # output parity -> padded-mid tap offsets
    for a in (0, 1):
        for b in (0, 1):
            t = [hbuf[:, sr:sr + Hd, sc:sc + Wd, :].reshape(M, Cm)
                 for sr in STARTS[a] for sc in STARTS[b]]
            pp = jnp.concatenate(t, axis=-1)         # (M, 4*Cm) bf16
            y = jnp.dot(pp, wu_ref[a, b], preferred_element_type=jnp.float32)
            y = y + bias                             # folded BatchNorm2d (eval) bias
            p = 2 * a + b
            o_ref[:, p:p + 1, :, :, :] = y.reshape(Nb, 1, Hd, Wd, Co).astype(o_ref.dtype)


# --------------------------- one-time weight packing ---------------------------

def pack_params(params):
    """Hoisted weight prep: im2col layouts, BN scale folded into ConvT weights, bf16."""
    wd = params["down_w"]                            # (4, 4, Ci, Cm)
    wu = params["up_w"]                              # (4, 4, Cm, Co)
    scale, bias = params["bn_scale"], params["bn_bias"]
    _, _, Ci, Cm = wd.shape
    Co = wu.shape[-1]

    # down weights, column order matches the kernel's patch: ((di*2+dj)*4 + 2r+c)*Ci + ci
    wd_flat = (wd.reshape(2, 2, 2, 2, Ci, Cm)        # (di, r, dj, c, ci, cm)
                 .transpose(0, 2, 1, 3, 4, 5)        # (di, dj, r, c, ci, cm)
                 .reshape(16 * Ci, Cm))

    # ConvTranspose weights per output parity; tap order matches the kernel's STARTS.
    DY = ((1, 3), (0, 2))
    wu_s = wu * scale                                # fold BatchNorm (eval) scale
    wu_pk = jnp.stack([
        jnp.stack([
            jnp.concatenate([wu_s[DY[a][k], DY[b][l]]
                             for k in range(2) for l in range(2)], axis=0)
            for b in range(2)], axis=0)
        for a in range(2)], axis=0)                  # (2, 2, 4*Cm, Co)

    return {"wd": wd_flat.astype(jnp.bfloat16),
            "wu": wu_pk.astype(jnp.bfloat16),
            "bias": bias.reshape(1, Co).astype(jnp.float32)}


# ------------------------------- wrapper -------------------------------------

def _pick_batch_block(N, Hd, Wd, target_m=256):
    """Images per grid step: fill the MXU M dim, but keep >=2 steps for megacore."""
    nb = max(1, min(N, target_m // max(1, Hd * Wd)))
    while N % nb != 0:
        nb -= 1
    if N > 1 and N // nb < 2:
        nb = max(1, nb // 2)
        while N % nb != 0:
            nb -= 1
    return nb


def unet_skip_block_forward(x_nchw, packed):
    """Innermost UnetSkipConnectionBlock forward (eval mode). NCHW in, NCHW out."""
    x = jnp.transpose(x_nchw, (0, 2, 3, 1))          # NCHW -> NHWC (lane-dense channels)
    N, H, W, Ci = x.shape
    assert H % 2 == 0 and W % 2 == 0, "stride-2 down/up path requires even H, W"
    Cm = packed["wd"].shape[1]
    Co = packed["wu"].shape[-1]
    assert packed["wd"].shape[0] == 16 * Ci
    Hd, Wd = H // 2, W // 2
    Hh, Wh = Hd + 1, Wd + 1                          # (H+2)//2, (W+2)//2

    # pad=1 + even/odd phase split with phases adjacent in the lane dim, so the
    # in-kernel im2col only needs 4 contiguous unit-stride tap-group slices.
    xp = jnp.pad(x, ((0, 0), (1, 1), (1, 1), (0, 0)))
    xr = (xp.reshape(N, Hh, 2, Wh, 2, Ci)
            .transpose(0, 1, 3, 2, 4, 5)
            .reshape(N, Hh, Wh, 4 * Ci))

    Nb = _pick_batch_block(N, Hd, Wd)

    out = pl.pallas_call(
        unet_inner_kernel,
        out_shape=jax.ShapeDtypeStruct((N, 4, Hd, Wd, Co), x.dtype),
        grid_spec=pltpu.PrefetchScalarGridSpec(
            num_scalar_prefetch=0,
            grid=(N // Nb,),
            in_specs=[
                pl.BlockSpec((Nb, Hh, Wh, 4 * Ci), lambda n: (n, 0, 0, 0)),
                pl.BlockSpec((16 * Ci, Cm), lambda n: (0, 0)),
                pl.BlockSpec((2, 2, 4 * Cm, Co), lambda n: (0, 0, 0, 0)),
                pl.BlockSpec((1, Co), lambda n: (0, 0)),
            ],
            out_specs=pl.BlockSpec((Nb, 4, Hd, Wd, Co), lambda n: (n, 0, 0, 0, 0)),
            scratch_shapes=[pltpu.VMEM((Nb, Hd + 2, Wd + 2, Cm), jnp.bfloat16)],
        ),
        compiler_params=pltpu.CompilerParams(
            dimension_semantics=("parallel",),       # shard batch steps across TCs (v7x)
            vmem_limit_bytes=48 * 1024 * 1024),      # sized from the v7x 64 MiB budget
    )(xr, packed["wd"], packed["wu"], packed["bias"])

    # parity-major -> spatial interleave + skip concat as wrapper-side layout plumbing
    # (kernel stores stay dense; x is read from HBM exactly once).
    up = (out.reshape(N, 2, 2, Hd, Wd, Co)
             .transpose(0, 3, 1, 4, 2, 5)
             .reshape(N, H, W, Co))
    y = jnp.concatenate([x, up], axis=-1)            # torch.cat([x, model(x)], 1)
    return jnp.transpose(y, (0, 3, 1, 2))            # NHWC -> NCHW


# --------------------------- parameter creation -------------------------------

def _fold_bn(gamma, beta, mean, var, eps=1e-5):
    scale = gamma / jnp.sqrt(var + eps)
    return scale, beta - mean * scale


def make_params(key, outer_nc, inner_nc, input_nc=None):
    if input_nc is None:
        input_nc = outer_nc                          # module default
    ks = iter(jax.random.split(key, 8))

    def conv_w(kh, kw, cin, cout):
        fan_in = kh * kw * cin
        return (jax.random.normal(next(ks), (kh, kw, cin, cout), jnp.float32)
                / jnp.sqrt(float(fan_in)))

    down_w = conv_w(4, 4, input_nc, inner_nc)        # Conv2d, bias=False (BatchNorm case)
    up_w = conv_w(4, 4, inner_nc, outer_nc)          # ConvTranspose2d, bias=False
    gamma = 1.0 + 0.1 * jax.random.normal(next(ks), (outer_nc,), jnp.float32)
    beta = 0.1 * jax.random.normal(next(ks), (outer_nc,), jnp.float32)
    mean = 0.1 * jax.random.normal(next(ks), (outer_nc,), jnp.float32)
    var = jnp.abs(1.0 + 0.1 * jax.random.normal(next(ks), (outer_nc,), jnp.float32))
    scale, bias = _fold_bn(gamma, beta, mean, var)
    return {"down_w": down_w, "up_w": up_w, "bn_scale": scale, "bn_bias": bias}


# ----------------------------- pure-JAX references -----------------------------

def ref_forward(x_nchw, params, *, bf16_mxu=False):
    """bf16_mxu=False: exact PyTorch (f32) semantics. True: same bf16-operand/f32-acc
    numerics path as the kernel (tight-tolerance check)."""
    cast = (lambda a: a.astype(jnp.bfloat16)) if bf16_mxu else (lambda a: a)
    x = jnp.transpose(x_nchw, (0, 2, 3, 1))
    scale, bias = params["bn_scale"], params["bn_bias"]
    h = jnp.where(x > 0, x, 0.2 * x)                                 # LeakyReLU(0.2)
    h = lax.conv_general_dilated(                                    # Conv2d k4 s2 p1
        cast(h), cast(params["down_w"]), window_strides=(2, 2),
        padding=((1, 1), (1, 1)), dimension_numbers=("NHWC", "HWIO", "NHWC"),
        preferred_element_type=jnp.float32)
    h = jnp.maximum(h, 0.0)                                          # ReLU
    wu = (params["up_w"] * scale) if bf16_mxu else params["up_w"]
    wu = cast(wu)[::-1, ::-1, :, :]                                  # spatial flip
    h = lax.conv_general_dilated(                                    # ConvT k4 s2 p1
        cast(h), wu, window_strides=(1, 1), padding=((2, 2), (2, 2)),
        lhs_dilation=(2, 2), dimension_numbers=("NHWC", "HWIO", "NHWC"),
        preferred_element_type=jnp.float32)
    h = (h + bias) if bf16_mxu else (h * scale + bias)               # BN (eval)
    y = jnp.concatenate([x, h], axis=-1)                             # skip concat
    return jnp.transpose(y, (0, 3, 1, 2))


# ------------------------------------ main ------------------------------------

if __name__ == "__main__":
    key = jax.random.PRNGKey(0)
    kx, kp = jax.random.split(key)

    N, outer_nc, inner_nc, Hs, Ws = 2, 4, 32, 16, 16
    x = jax.random.normal(kx, (N, outer_nc, Hs, Ws), jnp.float32)    # NCHW input
    params = make_params(kp, outer_nc, inner_nc)
    packed = pack_params(params)                                     # one-time weight prep

    fwd = jax.jit(unet_skip_block_forward)
    out = jax.block_until_ready(fwd(x, packed))

    assert out.shape == (N, 2 * outer_nc, Hs, Ws), out.shape
    ref_bf = ref_forward(x, params, bf16_mxu=True)                   # numerics-matched ref
    ref_f32 = ref_forward(x, params, bf16_mxu=False)                 # PyTorch f32 semantics
    err_bf = float(jnp.max(jnp.abs(out - ref_bf)))
    err_f32 = float(jnp.max(jnp.abs(out - ref_f32)))
    assert jnp.allclose(out, ref_bf, atol=1e-3, rtol=1e-3), err_bf
    assert jnp.allclose(out, ref_f32, atol=5e-2, rtol=5e-2), err_f32

    print("KERNEL_OK")
</pallas_src>

<mosaic_0001>
module attributes {stable_mosaic.version = 11 : i64} {
  func.func @unet_inner_kernel(%arg0: i32, %arg1: memref<1x9x9x16xf32, #tpu.memory_space<vmem>>, %arg2: memref<64x32xbf16, #tpu.memory_space<vmem>>, %arg3: memref<2x2x128x4xbf16, #tpu.memory_space<vmem>>, %arg4: memref<1x4xf32, #tpu.memory_space<vmem>>, %arg5: memref<1x4x8x8x4xf32, #tpu.memory_space<vmem>>, %arg6: memref<1x10x10x32xbf16, #tpu.memory_space<vmem>>) attributes {dimension_semantics = [#tpu.dimension_semantics<parallel>], iteration_bounds = array<i64: 2>, scalar_prefetch = 0 : i64, scratch_operands = 1 : i64, tpu.core_type = #tpu.core_type<tc>, window_params = [{transform_indices = @transform_0, window_bounds = array<i64: 1, 9, 9, 16>}, {pipeline_mode = #tpu.pipeline_mode<synchronous>, transform_indices = @transform_1, window_bounds = array<i64: 64, 32>}, {pipeline_mode = #tpu.pipeline_mode<synchronous>, transform_indices = @transform_2, window_bounds = array<i64: 2, 2, 128, 4>}, {pipeline_mode = #tpu.pipeline_mode<synchronous>, transform_indices = @transform_3, window_bounds = array<i64: 1, 4>}, {transform_indices = @transform_4, window_bounds = array<i64: 1, 4, 8, 8, 4>}]} {
    %c0 = arith.constant 0 : index
    %c0_0 = arith.constant 0 : index
    %c0_1 = arith.constant 0 : index
    %c0_2 = arith.constant 0 : index
    %0 = vector.load %arg1[%c0, %c0_0, %c0_1, %c0_2] : memref<1x9x9x16xf32, #tpu.memory_space<vmem>>, vector<1x9x9x16xf32>
    %cst = arith.constant 0.000000e+00 : f32
    %1 = vector.broadcast %cst : f32 to vector<1x9x9x16xf32>
    %2 = arith.cmpf ogt, %0, %1 : vector<1x9x9x16xf32>
    %cst_3 = arith.constant 2.000000e-01 : f32
    %3 = vector.broadcast %cst_3 : f32 to vector<1x9x9x16xf32>
    %4 = arith.mulf %3, %0 : vector<1x9x9x16xf32>
    %5 = arith.select %2, %0, %4 : vector<1x9x9x16xi1>, vector<1x9x9x16xf32>
    %6 = arith.truncf %5 : vector<1x9x9x16xf32> to vector<1x9x9x16xbf16>
    %7 = vector.extract_strided_slice %6 {offsets = [0, 0, 0, 0], sizes = [1, 8, 8, 16], strides = [1, 1, 1, 1]} : vector<1x9x9x16xbf16> to vector<1x8x8x16xbf16>
    %8 = vector.shape_cast %7 : vector<1x8x8x16xbf16> to vector<64x16xbf16>
    %9 = vector.extract_strided_slice %6 {offsets = [0, 0, 1, 0], sizes = [1, 8, 8, 16], strides = [1, 1, 1, 1]} : vector<1x9x9x16xbf16> to vector<1x8x8x16xbf16>
    %10 = vector.shape_cast %9 : vector<1x8x8x16xbf16> to vector<64x16xbf16>
    %11 = vector.extract_strided_slice %6 {offsets = [0, 1, 0, 0], sizes = [1, 8, 8, 16], strides = [1, 1, 1, 1]} : vector<1x9x9x16xbf16> to vector<1x8x8x16xbf16>
    %12 = vector.shape_cast %11 : vector<1x8x8x16xbf16> to vector<64x16xbf16>
    %13 = vector.extract_strided_slice %6 {offsets = [0, 1, 1, 0], sizes = [1, 8, 8, 16], strides = [1, 1, 1, 1]} : vector<1x9x9x16xbf16> to vector<1x8x8x16xbf16>
    %14 = vector.shape_cast %13 : vector<1x8x8x16xbf16> to vector<64x16xbf16>
    %15 = tpu.concatenate %8, %10, %12, %14 in 1 : vector<64x16xbf16>, vector<64x16xbf16>, vector<64x16xbf16>, vector<64x16xbf16> -> vector<64x64xbf16>
    %c0_4 = arith.constant 0 : index
    %c0_5 = arith.constant 0 : index
    %16 = vector.load %arg2[%c0_4, %c0_5] : memref<64x32xbf16, #tpu.memory_space<vmem>>, vector<64x32xbf16>
    %cst_6 = arith.constant dense<0.000000e+00> : vector<64x32xf32>
    %17 = tpu.matmul %15, %16, %cst_6 {dimension_numbers = #tpu.dot_dimension_numbers<[1], [0], [0], [1], [0, 0, 1, 1], [], []>} : vector<64x64xbf16>, vector<64x32xbf16>, vector<64x32xf32> -> vector<64x32xf32>
    %cst_7 = arith.constant 0.000000e+00 : f32
    %18 = vector.broadcast %cst_7 : f32 to vector<64x32xf32>
    %19 = arith.maximumf %17, %18 : vector<64x32xf32>
    %cst_8 = arith.constant 0.000000e+00 : bf16
    %20 = vector.broadcast %cst_8 : bf16 to vector<1x1x10x32xbf16>
    %cst_9 = arith.constant 0.000000e+00 : bf16
    %21 = vector.broadcast %cst_9 : bf16 to vector<1x10x1x32xbf16>
    %c0_10 = arith.constant 0 : index
    %c0_11 = arith.constant 0 : index
    %c0_12 = arith.constant 0 : index
    %c0_13 = arith.constant 0 : index
    %22 = vector.load %arg6[%c0_10, %c0_11, %c0_12, %c0_13] : memref<1x10x10x32xbf16, #tpu.memory_space<vmem>>, vector<1x1x10x32xbf16>
    tpu.vector_store %arg6[%c0_10, %c0_11, %c0_12, %c0_13], %20 {strides = array<i32>} : memref<1x10x10x32xbf16, #tpu.memory_space<vmem>>, vector<1x1x10x32xbf16>,
    %c0_14 = arith.constant 0 : index
    %c9 = arith.constant 9 : index
    %c0_15 = arith.constant 0 : index
    %c0_16 = arith.constant 0 : index
    %23 = vector.load %arg6[%c0_14, %c9, %c0_15, %c0_16] : memref<1x10x10x32xbf16, #tpu.memory_space<vmem>>, vector<1x1x10x32xbf16>
    tpu.vector_store %arg6[%c0_14, %c9, %c0_15, %c0_16], %20 {strides = array<i32>} : memref<1x10x10x32xbf16, #tpu.memory_space<vmem>>, vector<1x1x10x32xbf16>,
    %c0_17 = arith.constant 0 : index
    %c0_18 = arith.constant 0 : index
    %c0_19 = arith.constant 0 : index
    %c0_20 = arith.constant 0 : index
    %24 = vector.load %arg6[%c0_17, %c0_18, %c0_19, %c0_20] : memref<1x10x10x32xbf16, #tpu.memory_space<vmem>>, vector<1x10x1x32xbf16>
    tpu.vector_store %arg6[%c0_17, %c0_18, %c0_19, %c0_20], %21 {strides = array<i32>} : memref<1x10x10x32xbf16, #tpu.memory_space<vmem>>, vector<1x10x1x32xbf16>,
    %c0_21 = arith.constant 0 : index
    %c0_22 = arith.constant 0 : index
    %c9_23 = arith.constant 9 : index
    %c0_24 = arith.constant 0 : index
    %25 = vector.load %arg6[%c0_21, %c0_22, %c9_23, %c0_24] : memref<1x10x10x32xbf16, #tpu.memory_space<vmem>>, vector<1x10x1x32xbf16>
    tpu.vector_store %arg6[%c0_21, %c0_22, %c9_23, %c0_24], %21 {strides = array<i32>} : memref<1x10x10x32xbf16, #tpu.memory_space<vmem>>, vector<1x10x1x32xbf16>,
    %26 = vector.shape_cast %19 : vector<64x32xf32> to vector<1x8x8x32xf32>
    %27 = arith.truncf %26 : vector<1x8x8x32xf32> to vector<1x8x8x32xbf16>
    %c0_25 = arith.constant 0 : index
    %c1 = arith.constant 1 : index
    %c1_26 = arith.constant 1 : index
    %c0_27 = arith.constant 0 : index
    %28 = vector.load %arg6[%c0_25, %c1, %c1_26, %c0_27] : memref<1x10x10x32xbf16, #tpu.memory_space<vmem>>, vector<1x8x8x32xbf16>
    tpu.vector_store %arg6[%c0_25, %c1, %c1_26, %c0_27], %27 {strides = array<i32>} : memref<1x10x10x32xbf16, #tpu.memory_space<vmem>>, vector<1x8x8x32xbf16>,
    %c0_28 = arith.constant 0 : index
    %c0_29 = arith.constant 0 : index
    %29 = vector.load %arg4[%c0_28, %c0_29] : memref<1x4xf32, #tpu.memory_space<vmem>>, vector<1x4xf32>
    %30 = vector.shape_cast %29 : vector<1x4xf32> to vector<4xf32>
    %c0_30 = arith.constant 0 : index
    %c1_31 = arith.constant 1 : index
    %c1_32 = arith.constant 1 : index
    %c0_33 = arith.constant 0 : index
    %31 = vector.load %arg6[%c0_30, %c1_31, %c1_32, %c0_33] : memref<1x10x10x32xbf16, #tpu.memory_space<vmem>>, vector<1x8x8x32xbf16>
    %32 = vector.shape_cast %31 : vector<1x8x8x32xbf16> to vector<64x32xbf16>
    %c0_34 = arith.constant 0 : index
    %c1_35 = arith.constant 1 : index
    %c0_36 = arith.constant 0 : index
    %c0_37 = arith.constant 0 : index
    %33 = vector.load %arg6[%c0_34, %c1_35, %c0_36, %c0_37] : memref<1x10x10x32xbf16, #tpu.memory_space<vmem>>, vector<1x8x8x32xbf16>
    %34 = vector.shape_cast %33 : vector<1x8x8x32xbf16> to vector<64x32xbf16>
    %c0_38 = arith.constant 0 : index
    %c0_39 = arith.constant 0 : index
    %c1_40 = arith.constant 1 : index
    %c0_41 = arith.constant 0 : index
    %35 = vector.load %arg6[%c0_38, %c0_39, %c1_40, %c0_41] : memref<1x10x10x32xbf16, #tpu.memory_space<vmem>>, vector<1x8x8x32xbf16>
    %36 = vector.shape_cast %35 : vector<1x8x8x32xbf16> to vector<64x32xbf16>
    %c0_42 = arith.constant 0 : index
    %c0_43 = arith.constant 0 : index
    %c0_44 = arith.constant 0 : index
    %c0_45 = arith.constant 0 : index
    %37 = vector.load %arg6[%c0_42, %c0_43, %c0_44, %c0_45] : memref<1x10x10x32xbf16, #tpu.memory_space<vmem>>, vector<1x8x8x32xbf16>
    %38 = vector.shape_cast %37 : vector<1x8x8x32xbf16> to vector<64x32xbf16>
    %39 = tpu.concatenate %32, %34, %36, %38 in 1 : vector<64x32xbf16>, vector<64x32xbf16>, vector<64x32xbf16>, vector<64x32xbf16> -> vector<64x128xbf16>
    %c0_46 = arith.constant 0 : index
    %c0_47 = arith.constant 0 : index
    %c0_48 = arith.constant 0 : index
    %c0_49 = arith.constant 0 : index
    %40 = vector.load %arg3[%c0_46, %c0_47, %c0_48, %c0_49] : memref<2x2x128x4xbf16, #tpu.memory_space<vmem>>, vector<1x1x128x4xbf16>
    %41 = vector.shape_cast %40 : vector<1x1x128x4xbf16> to vector<128x4xbf16>
    %cst_50 = arith.constant dense<0.000000e+00> : vector<64x4xf32>
    %42 = tpu.matmul %39, %41, %cst_50 {dimension_numbers = #tpu.dot_dimension_numbers<[1], [0], [0], [1], [0, 0, 1, 1], [], []>} : vector<64x128xbf16>, vector<128x4xbf16>, vector<64x4xf32> -> vector<64x4xf32>
    %43 = vector.shape_cast %30 : vector<4xf32> to vector<1x4xf32>
    %44 = vector.broadcast %43 : vector<1x4xf32> to vector<64x4xf32>
    %45 = arith.addf %42, %44 : vector<64x4xf32>
    %46 = vector.shape_cast %45 : vector<64x4xf32> to vector<1x1x8x8x4xf32>
    %c0_51 = arith.constant 0 : index
    %c0_52 = arith.constant 0 : index
    %c0_53 = arith.constant 0 : index
    %c0_54 = arith.constant 0 : index
    %c0_55 = arith.constant 0 : index
    %47 = vector.load %arg5[%c0_51, %c0_52, %c0_53, %c0_54, %c0_55] : memref<1x4x8x8x4xf32, #tpu.memory_space<vmem>>, vector<1x1x8x8x4xf32>
    tpu.vector_store %arg5[%c0_51, %c0_52, %c0_53, %c0_54, %c0_55], %46 {strides = array<i32>} : memref<1x4x8x8x4xf32, #tpu.memory_space<vmem>>, vector<1x1x8x8x4xf32>,
    %c0_56 = arith.constant 0 : index
    %c1_57 = arith.constant 1 : index
    %c2 = arith.constant 2 : index
    %c0_58 = arith.constant 0 : index
    %48 = vector.load %arg6[%c0_56, %c1_57, %c2, %c0_58] : memref<1x10x10x32xbf16, #tpu.memory_space<vmem>>, vector<1x8x8x32xbf16>
    %49 = vector.shape_cast %48 : vector<1x8x8x32xbf16> to vector<64x32xbf16>
    %c0_59 = arith.constant 0 : index
    %c1_60 = arith.constant 1 : index
    %c1_61 = arith.constant 1 : index
    %c0_62 = arith.constant 0 : index
    %50 = vector.load %arg6[%c0_59, %c1_60, %c1_61, %c0_62] : memref<1x10x10x32xbf16, #tpu.memory_space<vmem>>, vector<1x8x8x32xbf16>
    %51 = vector.shape_cast %50 : vector<1x8x8x32xbf16> to vector<64x32xbf16>
    %c0_63 = arith.constant 0 : index
    %c0_64 = arith.constant 0 : index
    %c2_65 = arith.constant 2 : index
    %c0_66 = arith.constant 0 : index
    %52 = vector.load %arg6[%c0_63, %c0_64, %c2_65, %c0_66] : memref<1x10x10x32xbf16, #tpu.memory_space<vmem>>, vector<1x8x8x32xbf16>
    %53 = vector.shape_cast %52 : vector<1x8x8x32xbf16> to vector<64x32xbf16>
    %c0_67 = arith.constant 0 : index
    %c0_68 = arith.constant 0 : index
    %c1_69 = arith.constant 1 : index
    %c0_70 = arith.constant 0 : index
    %54 = vector.load %arg6[%c0_67, %c0_68, %c1_69, %c0_70] : memref<1x10x10x32xbf16, #tpu.memory_space<vmem>>, vector<1x8x8x32xbf16>
    %55 = vector.shape_cast %54 : vector<1x8x8x32xbf16> to vector<64x32xbf16>
    %56 = tpu.concatenate %49, %51, %53, %55 in 1 : vector<64x32xbf16>, vector<64x32xbf16>, vector<64x32xbf16>, vector<64x32xbf16> -> vector<64x128xbf16>
    %c0_71 = arith.constant 0 : index
    %c1_72 = arith.constant 1 : index
    %c0_73 = arith.constant 0 : index
    %c0_74 = arith.constant 0 : index
    %57 = vector.load %arg3[%c0_71, %c1_72, %c0_73, %c0_74] : memref<2x2x128x4xbf16, #tpu.memory_space<vmem>>, vector<1x1x128x4xbf16>
    %58 = vector.shape_cast %57 : vector<1x1x128x4xbf16> to vector<128x4xbf16>
    %cst_75 = arith.constant dense<0.000000e+00> : vector<64x4xf32>
    %59 = tpu.matmul %56, %58, %cst_75 {dimension_numbers = #tpu.dot_dimension_numbers<[1], [0], [0], [1], [0, 0, 1, 1], [], []>} : vector<64x128xbf16>, vector<128x4xbf16>, vector<64x4xf32> -> vector<64x4xf32>
    %60 = vector.shape_cast %30 : vector<4xf32> to vector<1x4xf32>
    %61 = vector.broadcast %60 : vector<1x4xf32> to vector<64x4xf32>
    %62 = arith.addf %59, %61 : vector<64x4xf32>
    %63 = vector.shape_cast %62 : vector<64x4xf32> to vector<1x1x8x8x4xf32>
    %c0_76 = arith.constant 0 : index
    %c1_77 = arith.constant 1 : index
    %c0_78 = arith.constant 0 : index
    %c0_79 = arith.constant 0 : index
    %c0_80 = arith.constant 0 : index
    %64 = vector.load %arg5[%c0_76, %c1_77, %c0_78, %c0_79, %c0_80] : memref<1x4x8x8x4xf32, #tpu.memory_space<vmem>>, vector<1x1x8x8x4xf32>
    tpu.vector_store %arg5[%c0_76, %c1_77, %c0_78, %c0_79, %c0_80], %63 {strides = array<i32>} : memref<1x4x8x8x4xf32, #tpu.memory_space<vmem>>, vector<1x1x8x8x4xf32>,
    %c0_81 = arith.constant 0 : index
    %c2_82 = arith.constant 2 : index
    %c1_83 = arith.constant 1 : index
    %c0_84 = arith.constant 0 : index
    %65 = vector.load %arg6[%c0_81, %c2_82, %c1_83, %c0_84] : memref<1x10x10x32xbf16, #tpu.memory_space<vmem>>, vector<1x8x8x32xbf16>
    %66 = vector.shape_cast %65 : vector<1x8x8x32xbf16> to vector<64x32xbf16>
    %c0_85 = arith.constant 0 : index
    %c2_86 = arith.constant 2 : index
    %c0_87 = arith.constant 0 : index
    %c0_88 = arith.constant 0 : index
    %67 = vector.load %arg6[%c0_85, %c2_86, %c0_87, %c0_88] : memref<1x10x10x32xbf16, #tpu.memory_space<vmem>>, vector<1x8x8x32xbf16>
    %68 = vector.shape_cast %67 : vector<1x8x8x32xbf16> to vector<64x32xbf16>
    %c0_89 = arith.constant 0 : index
    %c1_90 = arith.constant 1 : index
    %c1_91 = arith.constant 1 : index
    %c0_92 = arith.constant 0 : index
    %69 = vector.load %arg6[%c0_89, %c1_90, %c1_91, %c0_92] : memref<1x10x10x32xbf16, #tpu.memory_space<vmem>>, vector<1x8x8x32xbf16>
    %70 = vector.shape_cast %69 : vector<1x8x8x32xbf16> to vector<64x32xbf16>
    %c0_93 = arith.constant 0 : index
    %c1_94 = arith.constant 1 : index
    %c0_95 = arith.constant 0 : index
    %c0_96 = arith.constant 0 : index
    %71 = vector.load %arg6[%c0_93, %c1_94, %c0_95, %c0_96] : memref<1x10x10x32xbf16, #tpu.memory_space<vmem>>, vector<1x8x8x32xbf16>
    %72 = vector.shape_cast %71 : vector<1x8x8x32xbf16> to vector<64x32xbf16>
    %73 = tpu.concatenate %66, %68, %70, %72 in 1 : vector<64x32xbf16>, vector<64x32xbf16>, vector<64x32xbf16>, vector<64x32xbf16> -> vector<64x128xbf16>
    %c1_97 = arith.constant 1 : index
    %c0_98 = arith.constant 0 : index
    %c0_99 = arith.constant 0 : index
    %c0_100 = arith.constant 0 : index
    %74 = vector.load %arg3[%c1_97, %c0_98, %c0_99, %c0_100] : memref<2x2x128x4xbf16, #tpu.memory_space<vmem>>, vector<1x1x128x4xbf16>
    %75 = vector.shape_cast %74 : vector<1x1x128x4xbf16> to vector<128x4xbf16>
    %cst_101 = arith.constant dense<0.000000e+00> : vector<64x4xf32>
    %76 = tpu.matmul %73, %75, %cst_101 {dimension_numbers = #tpu.dot_dimension_numbers<[1], [0], [0], [1], [0, 0, 1, 1], [], []>} : vector<64x128xbf16>, vector<128x4xbf16>, vector<64x4xf32> -> vector<64x4xf32>
    %77 = vector.shape_cast %30 : vector<4xf32> to vector<1x4xf32>
    %78 = vector.broadcast %77 : vector<1x4xf32> to vector<64x4xf32>
    %79 = arith.addf %76, %78 : vector<64x4xf32>
    %80 = vector.shape_cast %79 : vector<64x4xf32> to vector<1x1x8x8x4xf32>
    %c0_102 = arith.constant 0 : index
    %c2_103 = arith.constant 2 : index
    %c0_104 = arith.constant 0 : index
    %c0_105 = arith.constant 0 : index
    %c0_106 = arith.constant 0 : index
    %81 = vector.load %arg5[%c0_102, %c2_103, %c0_104, %c0_105, %c0_106] : memref<1x4x8x8x4xf32, #tpu.memory_space<vmem>>, vector<1x1x8x8x4xf32>
    tpu.vector_store %arg5[%c0_102, %c2_103, %c0_104, %c0_105, %c0_106], %80 {strides = array<i32>} : memref<1x4x8x8x4xf32, #tpu.memory_space<vmem>>, vector<1x1x8x8x4xf32>,
    %c0_107 = arith.constant 0 : index
    %c2_108 = arith.constant 2 : index
    %c2_109 = arith.constant 2 : index
    %c0_110 = arith.constant 0 : index
    %82 = vector.load %arg6[%c0_107, %c2_108, %c2_109, %c0_110] : memref<1x10x10x32xbf16, #tpu.memory_space<vmem>>, vector<1x8x8x32xbf16>
    %83 = vector.shape_cast %82 : vector<1x8x8x32xbf16> to vector<64x32xbf16>
    %c0_111 = arith.constant 0 : index
    %c2_112 = arith.constant 2 : index
    %c1_113 = arith.constant 1 : index
    %c0_114 = arith.constant 0 : index
    %84 = vector.load %arg6[%c0_111, %c2_112, %c1_113, %c0_114] : memref<1x10x10x32xbf16, #tpu.memory_space<vmem>>, vector<1x8x8x32xbf16>
    %85 = vector.shape_cast %84 : vector<1x8x8x32xbf16> to vector<64x32xbf16>
    %c0_115 = arith.constant 0 : index
    %c1_116 = arith.constant 1 : index
    %c2_117 = arith.constant 2 : index
    %c0_118 = arith.constant 0 : index
    %86 = vector.load %arg6[%c0_115, %c1_116, %c2_117, %c0_118] : memref<1x10x10x32xbf16, #tpu.memory_space<vmem>>, vector<1x8x8x32xbf16>
    %87 = vector.shape_cast %86 : vector<1x8x8x32xbf16> to vector<64x32xbf16>
    %c0_119 = arith.constant 0 : index
    %c1_120 = arith.constant 1 : index
    %c1_121 = arith.constant 1 : index
    %c0_122 = arith.constant 0 : index
    %88 = vector.load %arg6[%c0_119, %c1_120, %c1_121, %c0_122] : memref<1x10x10x32xbf16, #tpu.memory_space<vmem>>, vector<1x8x8x32xbf16>
    %89 = vector.shape_cast %88 : vector<1x8x8x32xbf16> to vector<64x32xbf16>
    %90 = tpu.concatenate %83, %85, %87, %89 in 1 : vector<64x32xbf16>, vector<64x32xbf16>, vector<64x32xbf16>, vector<64x32xbf16> -> vector<64x128xbf16>
    %c1_123 = arith.constant 1 : index
    %c1_124 = arith.constant 1 : index
    %c0_125 = arith.constant 0 : index
    %c0_126 = arith.constant 0 : index
    %91 = vector.load %arg3[%c1_123, %c1_124, %c0_125, %c0_126] : memref<2x2x128x4xbf16, #tpu.memory_space<vmem>>, vector<1x1x128x4xbf16>
    %92 = vector.shape_cast %91 : vector<1x1x128x4xbf16> to vector<128x4xbf16>
    %cst_127 = arith.constant dense<0.000000e+00> : vector<64x4xf32>
    %93 = tpu.matmul %90, %92, %cst_127 {dimension_numbers = #tpu.dot_dimension_numbers<[1], [0], [0], [1], [0, 0, 1, 1], [], []>} : vector<64x128xbf16>, vector<128x4xbf16>, vector<64x4xf32> -> vector<64x4xf32>
    %94 = vector.shape_cast %30 : vector<4xf32> to vector<1x4xf32>
    %95 = vector.broadcast %94 : vector<1x4xf32> to vector<64x4xf32>
    %96 = arith.addf %93, %95 : vector<64x4xf32>
    %97 = vector.shape_cast %96 : vector<64x4xf32> to vector<1x1x8x8x4xf32>
    %c0_128 = arith.constant 0 : index
    %c3 = arith.constant 3 : index
    %c0_129 = arith.constant 0 : index
    %c0_130 = arith.constant 0 : index
    %c0_131 = arith.constant 0 : index
    %98 = vector.load %arg5[%c0_128, %c3, %c0_129, %c0_130, %c0_131] : memref<1x4x8x8x4xf32, #tpu.memory_space<vmem>>, vector<1x1x8x8x4xf32>
    tpu.vector_store %arg5[%c0_128, %c3, %c0_129, %c0_130, %c0_131], %97 {strides = array<i32>} : memref<1x4x8x8x4xf32, #tpu.memory_space<vmem>>, vector<1x1x8x8x4xf32>,
    return
  }
  func.func @transform_0(%arg0: i32) -> (i32, i32, i32, i32) {
    %c0_i32 = arith.constant 0 : i32
    %c0_i32_0 = arith.constant 0 : i32
    %c0_i32_1 = arith.constant 0 : i32
    %c0_i32_2 = arith.constant 0 : i32
    return %arg0, %c0_i32, %c0_i32_0, %c0_i32_1 : i32, i32, i32, i32
  }
  func.func @transform_1(%arg0: i32) -> (i32, i32) {
    %c0_i32 = arith.constant 0 : i32
    %c0_i32_0 = arith.constant 0 : i32
    %c0_i32_1 = arith.constant 0 : i32
    return %c0_i32, %c0_i32_0 : i32, i32
  }
  func.func @transform_2(%arg0: i32) -> (i32, i32, i32, i32) {
    %c0_i32 = arith.constant 0 : i32
    %c0_i32_0 = arith.constant 0 : i32
    %c0_i32_1 = arith.constant 0 : i32
    %c0_i32_2 = arith.constant 0 : i32
    %c0_i32_3 = arith.constant 0 : i32
    return %c0_i32, %c0_i32_0, %c0_i32_1, %c0_i32_2 : i32, i32, i32, i32
  }
  func.func @transform_3(%arg0: i32) -> (i32, i32) {
    %c0_i32 = arith.constant 0 : i32
    %c0_i32_0 = arith.constant 0 : i32
    %c0_i32_1 = arith.constant 0 : i32
    return %c0_i32, %c0_i32_0 : i32, i32
  }
  func.func @transform_4(%arg0: i32) -> (i32, i32, i32, i32, i32) {
    %c0_i32 = arith.constant 0 : i32
    %c0_i32_0 = arith.constant 0 : i32
    %c0_i32_1 = arith.constant 0 : i32
    %c0_i32_2 = arith.constant 0 : i32
    %c0_i32_3 = arith.constant 0 : i32
    return %arg0, %c0_i32, %c0_i32_0, %c0_i32_1, %c0_i32_2 : i32, i32, i32, i32, i32
  }
}

</mosaic_0001>

<llo_original>
// kernel: unet_skip_block_forward.1
$region0: #{unet_skip_block_forward.1}
  #allocation0 [shape = 'u32[]', space=smem, size = 0x4, offset = 0x4, fixed_abs, tag = 'smem constant byte address 0x4 - core index']
  #allocation1 [shape = 'u32[144,128]{1,0:T(1,128)}', space=vmem, size = 0x12000, scoped, tag = 'internal scratch']
  #allocation2 [shape = 'bf16[1,10,10,32]{3,2,1,0:T(8,128)(2,1)}', space=vmem, size = 0xa000, scoped, tag = 'scratch operand']
  %s0 = inlined_call_operand.vmem [shape: f32[2,9,9,16], index: 0, kind: input, shape index: {}]
  %s1 = inlined_call_operand.vmem [shape: bf16[64,32], index: 1, kind: input, shape index: {}]
  %s2 = inlined_call_operand.vmem [shape: bf16[2,2,128,4], index: 2, kind: input, shape index: {}]
  %s3 = inlined_call_operand.vmem [shape: f32[1,4], index: 3, kind: input, shape index: {}]
  %s4 = inlined_call_operand.vmem [shape: f32[2,4,8,8,4], index: 4, kind: output, shape index: {}]
  %s5 = sld [smem:[#allocation0]]
  $region49: #{unet_skip_block_forward.1} parent=0
    _
  %s7 = ssub.s32 1, %s5
  %s8 = scalar_select 0, %s7, %s5
  loop: start=0, step=1, limit=4
  $region2: #{unet_skip_block_forward.1} parent=0 // loop_pre_header
    _
  $region3: #{unet_skip_block_forward.1} parent=0 // loop_header
    %s10 = sphi 0, %s14
    %p11 = scmp.ge.s32.totalorder %s10, 4
    %s20 = sphi 0, %s22
    %s23 = sphi 0, %s20
    %s24 = sphi 0, %s23
    %s40 = sphi 0, %s24
    %s44 = sphi 0, %s44
    %s46 = sphi 0, %s44
    %s47 = sphi 0, %s46
    %s61 = sphi 0, %s47
    %s65 = sphi 0, %s65
    %s67 = sphi 0, %s65
    %s68 = sphi 0, %s67
    %s82 = sphi 0, %s68
    %s86 = sphi 0, %s86
    %s88 = sphi 0, %s86
    %s89 = sphi 0, %s88
    %s103 = sphi 0, %s89
    %s109 = sphi 0, %s111
    %s112 = sphi 0, %s109
    %s113 = sphi 0, %s112
    %s129 = sphi 0, %s113
  $region4: #{unet_skip_block_forward.1} parent=0 // loop_header_branch
    %13 = sbr.rel (%p11) target = $region8
  $region5: #{unet_skip_block_forward.1} parent=0 // loop_body
    %s15 = ssub.s32 %s10, 1
    %s16 = ssub.s32 %s10, 2
    %s17 = sadd.s32 %s10, 1
    %s18 = ssub.s32 %s10, %s17
    %p19 = scmp.eq.s32.totalorder %s18, 0
    %s21 = sadd.s32 %s20, 1
    %s22 = scalar_select %p19, %s20, %s21
    %p25 = pneg %p19
    %p26 = scmp.eq.s32.totalorder %s10, 1
    %p27 = por %p25, %p26
    %p28 = scmp.ne.s32.totalorder %s20, %s23
    %p29 = scmp.eq.s32.totalorder %s10, 0
    %p30 = por %p28, %p29
    %p31 = scmp.ne.s32.totalorder %s20, %s23
    %p32 = scmp.eq.s32.totalorder %s15, 1
    %p33 = por %p31, %p32
    %p34 = scmp.ne.s32.totalorder %s23, %s24
    %p35 = scmp.eq.s32.totalorder %s15, 0
    %p36 = por %p34, %p35
    %p37 = scmp.ne.s32.totalorder %s23, %s24
    %p38 = scmp.eq.s32.totalorder %s16, 1
    %p39 = por %p37, %p38
    %p41 = scmp.ne.s32.totalorder %s24, %s40
    %p42 = scmp.eq.s32.totalorder %s16, 0
    %p43 = por %p41, %p42
    %s45 = sadd.s32 %s44, 1
    %p48 = scmp.eq.s32.totalorder %s10, 1
    %p49 = scmp.ne.s32.totalorder %s44, %s46
    %p50 = scmp.eq.s32.totalorder %s10, 0
    %p51 = por %p49, %p50
    %p52 = scmp.ne.s32.totalorder %s44, %s46
    %p53 = scmp.eq.s32.totalorder %s15, 1
    %p54 = por %p52, %p53
    %p55 = scmp.ne.s32.totalorder %s46, %s47
    %p56 = scmp.eq.s32.totalorder %s15, 0
    %p57 = por %p55, %p56
    %p58 = scmp.ne.s32.totalorder %s46, %s47
    %p59 = scmp.eq.s32.totalorder %s16, 1
    %p60 = por %p58, %p59
    %p62 = scmp.ne.s32.totalorder %s47, %s61
    %p63 = scmp.eq.s32.totalorder %s16, 0
    %p64 = por %p62, %p63
    %s66 = sadd.s32 %s65, 1
    %p69 = scmp.eq.s32.totalorder %s10, 1
    %p70 = scmp.ne.s32.totalorder %s65, %s67
    %p71 = scmp.eq.s32.totalorder %s10, 0
    %p72 = por %p70, %p71
    %p73 = scmp.ne.s32.totalorder %s65, %s67
    %p74 = scmp.eq.s32.totalorder %s15, 1
    %p75 = por %p73, %p74
    %p76 = scmp.ne.s32.totalorder %s67, %s68
    %p77 = scmp.eq.s32.totalorder %s15, 0
    %p78 = por %p76, %p77
    %p79 = scmp.ne.s32.totalorder %s67, %s68
    %p80 = scmp.eq.s32.totalorder %s16, 1
    %p81 = por %p79, %p80
    %p83 = scmp.ne.s32.totalorder %s68, %s82
    %p84 = scmp.eq.s32.totalorder %s16, 0
    %p85 = por %p83, %p84
    %s87 = sadd.s32 %s86, 1
    %p90 = scmp.eq.s32.totalorder %s10, 1
    %p91 = scmp.ne.s32.totalorder %s86, %s88
    %p92 = scmp.eq.s32.totalorder %s10, 0
    %p93 = por %p91, %p92
    %p94 = scmp.ne.s32.totalorder %s86, %s88
    %p95 = scmp.eq.s32.totalorder %s15, 1
    %p96 = por %p94, %p95
    %p97 = scmp.ne.s32.totalorder %s88, %s89
    %p98 = scmp.eq.s32.totalorder %s15, 0
    %p99 = por %p97, %p98
    %p100 = scmp.ne.s32.totalorder %s88, %s89
    %p101 = scmp.eq.s32.totalorder %s16, 1
    %p102 = por %p100, %p101
    %p104 = scmp.ne.s32.totalorder %s89, %s103
    %p105 = scmp.eq.s32.totalorder %s16, 0
    %p106 = por %p104, %p105
    %s107 = ssub.s32 %s10, %s17
    %p108 = scmp.eq.s32.totalorder %s107, 0
    %s110 = sadd.s32 %s109, 1
    %s111 = scalar_select %p108, %s109, %s110
    %p114 = pneg %p108
    %p115 = scmp.eq.s32.totalorder %s10, 1
    %p116 = por %p114, %p115
    %p117 = scmp.ne.s32.totalorder %s109, %s112
    %p118 = scmp.eq.s32.totalorder %s10, 0
    %p119 = por %p117, %p118
    %p120 = scmp.ne.s32.totalorder %s109, %s112
    %p121 = scmp.eq.s32.totalorder %s15, 1
    %p122 = por %p120, %p121
    %p123 = scmp.ne.s32.totalorder %s112, %s113
    %p124 = scmp.eq.s32.totalorder %s15, 0
    %p125 = por %p123, %p124
    %p126 = scmp.ne.s32.totalorder %s112, %s113
    %p127 = scmp.eq.s32.totalorder %s16, 1
    %p128 = por %p126, %p127
    %p130 = scmp.ne.s32.totalorder %s113, %s129
    %p131 = scmp.eq.s32.totalorder %s16, 0
    %p132 = por %p130, %p131
    %p133 = scmp.le.s32.totalorder 1, %s10
    %p134 = scmp.lt.s32.totalorder %s10, 3
    %p135 = pnand %p133, %p134
    %p136 = pneg %p135
    // Predicated region
    $region9: #{unet_skip_block_forward.1} parent=5 // pred_check
      _
    $region10: #{unet_skip_block_forward.1} parent=5 // pred_check_branch
      %138 = sbr.rel (%p135) target = $region12
    $region11: #{unet_skip_block_forward.1} parent=5 // pred_region
      %s139 = ssub.s32 %s10, 1
      // Predicated region
      $region13: #{unet_skip_block_forward.1} parent=11 // pred_check
        %p140 = pneg %p57
      $region14: #{unet_skip_block_forward.1} parent=11 // pred_check_branch
        %142 = sbr.rel (%p140) target = $region16
      $region15: #{unet_skip_block_forward.1} parent=11 // pred_region
        _
      $region16: #{unet_skip_block_forward.1} parent=11 // pred_fallthru
        _
      // Predicated region
      $region17: #{unet_skip_block_forward.1} parent=11 // pred_check
        %p143 = pneg %p78
      $region18: #{unet_skip_block_forward.1} parent=11 // pred_check_branch
        %145 = sbr.rel (%p143) target = $region20
      $region19: #{unet_skip_block_forward.1} parent=11 // pred_region
        _
      $region20: #{unet_skip_block_forward.1} parent=11 // pred_fallthru
        _
      // Predicated region
      $region21: #{unet_skip_block_forward.1} parent=11 // pred_check
        %p146 = pneg %p99
      $region22: #{unet_skip_block_forward.1} parent=11 // pred_check_branch
        %148 = sbr.rel (%p146) target = $region24
      $region23: #{unet_skip_block_forward.1} parent=11 // pred_region
        _
      $region24: #{unet_skip_block_forward.1} parent=11 // pred_fallthru
        _
    $region12: #{unet_skip_block_forward.1} parent=5 // pred_fallthru
      _
    %p149 = scmp.lt.s32.totalorder %s10, 2
    // Predicated region
    $region25: #{unet_skip_block_forward.1} parent=5 // pred_check
      %p150 = pneg %p149
    $region26: #{unet_skip_block_forward.1} parent=5 // pred_check_branch
      %152 = sbr.rel (%p150) target = $region28
    $region27: #{unet_skip_block_forward.1} parent=5 // pred_region
      // Predicated region
      $region29: #{unet_skip_block_forward.1} parent=27 // pred_check
        %p153 = pneg %p30
      $region30: #{unet_skip_block_forward.1} parent=27 // pred_check_branch
        %155 = sbr.rel (%p153) target = $region32
      $region31: #{unet_skip_block_forward.1} parent=27 // pred_region
        %p156 = scmp.lt.s32.totalorder %s10, 1
        %s157 = scalar_select %p156, %s10, 1
        %s158 = smul.addr %s157, 18
        %s159 = smul.addr %s158, 8
        %s160 = scalar_lea.vmem %s0, %s159
      $region32: #{unet_skip_block_forward.1} parent=27 // pred_fallthru
        _
    $region28: #{unet_skip_block_forward.1} parent=5 // pred_fallthru
      _
    %p161 = scmp.le.s32.totalorder 1, %s10
    %p162 = scmp.lt.s32.totalorder %s10, 3
    %p163 = pnand %p161, %p162
    %p164 = pneg %p163
    // Predicated region
    $region33: #{unet_skip_block_forward.1} parent=5 // pred_check
      _
    $region34: #{unet_skip_block_forward.1} parent=5 // pred_check_branch
      %166 = sbr.rel (%p163) target = $region36
    $region35: #{unet_skip_block_forward.1} parent=5 // pred_region
      %s167 = ssub.s32 %s10, 1
      %p168 = scmp.lt.s32.totalorder %s15, 1
      %s169 = scalar_select %p168, %s15, 1
      %s170 = smul.addr %s169, 18
      %s171 = smul.addr %s170, 8
      %s172 = scalar_lea.vmem %s0, %s171
      %p173 = pneg %p36
      %p174 = pneg %p33
      %p175 = pneg %p57
      %p176 = pneg %p54
      %p177 = pneg %p78
      %p178 = pneg %p75
      %p179 = pneg %p99
      %p180 = pneg %p96
      %p181 = pneg %p125
      %p182 = pneg %p122
      %p183 = scmp.lt.s32.totalorder %s15, 1
      %s184 = scalar_select %p183, %s15, 1
      %s185 = smul.addr %s184, 32
      %s186 = smul.addr %s185, 8
      %s187 = scalar_lea.vmem %s4, %s186
      %p188 = scmp.lt.s32.totalorder %s15, 1
      %s189 = scalar_select %p188, %s15, 1
      %s190 = smul.addr %s189, 18
      %s191 = smul.addr %s190, 8
      %s192 = scalar_lea.vmem %s0, %s191
      %p193 = scmp.lt.s32.totalorder %s15, 1
      %s194 = scalar_select %p193, %s15, 1
      %s195 = smul.addr %s194, 32
      %s196 = smul.addr %s195, 8
      %s197 = scalar_lea.vmem %s4, %s196
      %v199 = vld [vmem:[%s192] sm:$0xff]
      %v200 = vld [vmem:[%s192 + $0x8] sm:$0x1]
      %v201 = vld [vmem:[%s192 + $0x10] sm:$0xff]
      %v202 = vld [vmem:[%s192 + $0x18] sm:$0x1]
      %v203 = vld [vmem:[%s192 + $0x20] sm:$0xff]
      %v204 = vld [vmem:[%s192 + $0x28] sm:$0x1]
      %v205 = vld [vmem:[%s192 + $0x30] sm:$0xff]
      %v206 = vld [vmem:[%s192 + $0x38] sm:$0x1]
      %v207 = vld [vmem:[%s192 + $0x40] sm:$0xff]
      %v208 = vld [vmem:[%s192 + $0x48] sm:$0x1]
      %v209 = vld [vmem:[%s192 + $0x50] sm:$0xff]
      %v210 = vld [vmem:[%s192 + $0x58] sm:$0x1]
      %v211 = vld [vmem:[%s192 + $0x60] sm:$0xff]
      %v212 = vld [vmem:[%s192 + $0x68] sm:$0x1]
      %v213 = vld [vmem:[%s192 + $0x70] sm:$0xff]
      %v214 = vld [vmem:[%s192 + $0x78] sm:$0x1]
      %v215 = vld [vmem:[%s192 + $0x80] sm:$0xff]
      %v216 = vld [vmem:[%s192 + $0x88] sm:$0x1]
      %vm217 = vcmp.gt.f32.partialorder %v199, 0.0
      %vm218 = vcmp.gt.f32.partialorder %v200, 0.0
      %vm219 = vcmp.gt.f32.partialorder %v201, 0.0
      %vm220 = vcmp.gt.f32.partialorder %v202, 0.0
      %vm221 = vcmp.gt.f32.partialorder %v203, 0.0
      %vm222 = vcmp.gt.f32.partialorder %v204, 0.0
      %vm223 = vcmp.gt.f32.partialorder %v205, 0.0
      %vm224 = vcmp.gt.f32.partialorder %v206, 0.0
      %vm225 = vcmp.gt.f32.partialorder %v207, 0.0
      %vm226 = vcmp.gt.f32.partialorder %v208, 0.0
      %vm227 = vcmp.gt.f32.partialorder %v209, 0.0
      %vm228 = vcmp.gt.f32.partialorder %v210, 0.0
      %vm229 = vcmp.gt.f32.partialorder %v211, 0.0
      %vm230 = vcmp.gt.f32.partialorder %v212, 0.0
      %vm231 = vcmp.gt.f32.partialorder %v213, 0.0
      %vm232 = vcmp.gt.f32.partialorder %v214, 0.0
      %vm233 = vcmp.gt.f32.partialorder %v215, 0.0
      %vm234 = vcmp.gt.f32.partialorder %v216, 0.0
      %v235 = vmul.f32 %v199, 0.2
      %v236 = vmul.f32 %v200, 0.2
      %v237 = vmul.f32 %v201, 0.2
      %v238 = vmul.f32 %v202, 0.2
      %v239 = vmul.f32 %v203, 0.2
      %v240 = vmul.f32 %v204, 0.2
      %v241 = vmul.f32 %v205, 0.2
      %v242 = vmul.f32 %v206, 0.2
      %v243 = vmul.f32 %v207, 0.2
      %v244 = vmul.f32 %v208, 0.2
      %v245 = vmul.f32 %v209, 0.2
      %v246 = vmul.f32 %v210, 0.2
      %v247 = vmul.f32 %v211, 0.2
      %v248 = vmul.f32 %v212, 0.2
      %v249 = vmul.f32 %v213, 0.2
      %v250 = vmul.f32 %v214, 0.2
      %v251 = vmul.f32 %v215, 0.2
      %v252 = vmul.f32 %v216, 0.2
      %v253 = vsel %vm217, %v199, %v235
      %v254 = vsel %vm218, %v200, %v236
      %v255 = vsel %vm219, %v201, %v237
      %v256 = vsel %vm220, %v202, %v238
      %v257 = vsel %vm221, %v203, %v239
      %v258 = vsel %vm222, %v204, %v240
      %v259 = vsel %vm223, %v205, %v241
      %v260 = vsel %vm224, %v206, %v242
      %v261 = vsel %vm225, %v207, %v243
      %v262 = vsel %vm226, %v208, %v244
      %v263 = vsel %vm227, %v209, %v245
      %v264 = vsel %vm228, %v210, %v246
      %v265 = vsel %vm229, %v211, %v247
      %v266 = vsel %vm230, %v212, %v248
      %v267 = vsel %vm231, %v213, %v249
      %v268 = vsel %vm232, %v214, %v250
      %v269 = vsel %vm233, %v215, %v251
      %v270 = vsel %vm234, %v216, %v252
      %v271 = vpack.c.bf16 %v254, %v253
      %v272 = vpack.c.bf16 %v256, %v255
      %v273 = vpack.c.bf16 %v258, %v257
      %v274 = vpack.c.bf16 %v260, %v259
      %v275 = vpack.c.bf16 %v262, %v261
      %v276 = vpack.c.bf16 %v264, %v263
      %v277 = vpack.c.bf16 %v266, %v265
      %v278 = vpack.c.bf16 %v268, %v267
      %v279 = vpack.c.bf16 %v270, %v269
      %v288 = vunpack.c.l.b16 %v271
      %v289 = vunpack.c.h.b16 %v271
      %v290 = vunpack.c.l.b16 %v272
      %v291 = vunpack.c.h.b16 %v272
      %v292 = vunpack.c.l.b16 %v273
      %v293 = vunpack.c.h.b16 %v273
      %v294 = vunpack.c.l.b16 %v274
      %v295 = vunpack.c.h.b16 %v274
      %v296 = vunpack.c.l.b16 %v275
      %v297 = vunpack.c.h.b16 %v275
      %v298 = vunpack.c.l.b16 %v276
      %v299 = vunpack.c.h.b16 %v276
      %v300 = vunpack.c.l.b16 %v277
      %v301 = vunpack.c.h.b16 %v277
      %v302 = vunpack.c.l.b16 %v278
      %v303 = vunpack.c.h.b16 %v278
      %v304 = vpack.c.b16 %v288, %v288
      %v305 = vpack.c.b16 %v289, %v289
      %v306 = vpack.c.b16 %v290, %v290
      %v307 = vpack.c.b16 %v291, %v291
      %v308 = vpack.c.b16 %v292, %v292
      %v309 = vpack.c.b16 %v293, %v293
      %v310 = vpack.c.b16 %v294, %v294
      %v311 = vpack.c.b16 %v295, %v295
      %v312 = vpack.c.b16 %v296, %v296
      %v313 = vpack.c.b16 %v297, %v297
      %v314 = vpack.c.b16 %v298, %v298
      %v315 = vpack.c.b16 %v299, %v299
      %v316 = vpack.c.b16 %v300, %v300
      %v317 = vpack.c.b16 %v301, %v301
      %v318 = vpack.c.b16 %v302, %v302
      %v319 = vpack.c.b16 %v303, %v303
      %vm320 = vsmask.f32 3328
      %vm321 = vsmask.f32 7440
      %vm322 = vmor %vm320, %vm321
      %v324 = vshrl.u32 %v304, 16
      %v326 = vrot.slane %v324, 4
      %v327 = vshll.u32 %v304, 16
      %v329 = vrot.slane %v327, 5
      %v330 = vor.u32 %v326, %v329
      %v331 = vrot.slane %v330, 4
      %v333 = vshll.u32 %v305, 16
      %v335 = vrot.slane %v333, 5
      %v336 = vsel %vm322, %v331, %v335
      %v338 = vshrl.u32 %v306, 16
      %v340 = vrot.slane %v338, 4
      %v341 = vshll.u32 %v306, 16
      %v343 = vrot.slane %v341, 5
      %v344 = vor.u32 %v340, %v343
      %v345 = vrot.slane %v344, 4
      %v347 = vshll.u32 %v307, 16
      %v349 = vrot.slane %v347, 5
      %v350 = vsel %vm322, %v345, %v349
      %v352 = vshrl.u32 %v308, 16
      %v354 = vrot.slane %v352, 4
      %v355 = vshll.u32 %v308, 16
      %v357 = vrot.slane %v355, 5
      %v358 = vor.u32 %v354, %v357
      %v359 = vrot.slane %v358, 4
      %v361 = vshll.u32 %v309, 16
      %v363 = vrot.slane %v361, 5
      %v364 = vsel %vm322, %v359, %v363
      %v366 = vshrl.u32 %v310, 16
      %v368 = vrot.slane %v366, 4
      %v369 = vshll.u32 %v310, 16
      %v371 = vrot.slane %v369, 5
      %v372 = vor.u32 %v368, %v371
      %v373 = vrot.slane %v372, 4
      %v375 = vshll.u32 %v311, 16
      %v377 = vrot.slane %v375, 5
      %v378 = vsel %vm322, %v373, %v377
      %v380 = vshrl.u32 %v312, 16
      %v382 = vrot.slane %v380, 4
      %v383 = vshll.u32 %v312, 16
      %v385 = vrot.slane %v383, 5
      %v386 = vor.u32 %v382, %v385
      %v387 = vrot.slane %v386, 4
      %v389 = vshll.u32 %v313, 16
      %v391 = vrot.slane %v389, 5
      %v392 = vsel %vm322, %v387, %v391
      %v394 = vshrl.u32 %v314, 16
      %v396 = vrot.slane %v394, 4
      %v397 = vshll.u32 %v314, 16
      %v399 = vrot.slane %v397, 5
      %v400 = vor.u32 %v396, %v399
      %v401 = vrot.slane %v400, 4
      %v403 = vshll.u32 %v315, 16
      %v405 = vrot.slane %v403, 5
      %v406 = vsel %vm322, %v401, %v405
      %v408 = vshrl.u32 %v316, 16
      %v410 = vrot.slane %v408, 4
      %v411 = vshll.u32 %v316, 16
      %v413 = vrot.slane %v411, 5
      %v414 = vor.u32 %v410, %v413
      %v415 = vrot.slane %v414, 4
      %v417 = vshll.u32 %v317, 16
      %v419 = vrot.slane %v417, 5
      %v420 = vsel %vm322, %v415, %v419
      %v422 = vshrl.u32 %v318, 16
      %v424 = vrot.slane %v422, 4
      %v425 = vshll.u32 %v318, 16
      %v427 = vrot.slane %v425, 5
      %v428 = vor.u32 %v424, %v427
      %v429 = vrot.slane %v428, 4
      %v431 = vshll.u32 %v319, 16
      %v433 = vrot.slane %v431, 5
      %v434 = vsel %vm322, %v429, %v433
      %v436 = vunpack.c.l.b16 %v279
      %v437 = vunpack.c.h.b16 %v279
      %v438 = vpack.c.b16 %v436, %v436
      %v439 = vpack.c.b16 %v437, %v437
      %v441 = vshrl.u32 %v438, 16
      %v443 = vrot.slane %v441, 4
      %v444 = vshll.u32 %v438, 16
      %v446 = vrot.slane %v444, 5
      %v447 = vor.u32 %v443, %v446
      %v448 = vrot.slane %v447, 4
      %v450 = vshll.u32 %v439, 16
      %v452 = vrot.slane %v450, 5
      %v453 = vsel %vm322, %v448, %v452
      %v454 = vpack.c.b16 %v290, %v288
      %v455 = vpack.c.b16 %v294, %v292
      %v456 = vpack.c.b16 %v298, %v296
      %v457 = vpack.c.b16 %v302, %v300
      %v458 = vunpack.c.l.b16 %v336
      %v459 = vunpack.c.l.b16 %v350
      %v460 = vunpack.c.l.b16 %v364
      %v461 = vunpack.c.l.b16 %v378
      %v462 = vunpack.c.l.b16 %v392
      %v463 = vunpack.c.l.b16 %v406
      %v464 = vunpack.c.l.b16 %v420
      %v465 = vunpack.c.l.b16 %v434
      %v466 = vpack.c.b16 %v459, %v458
      %v467 = vpack.c.b16 %v461, %v460
      %v468 = vpack.c.b16 %v463, %v462
      %v469 = vpack.c.b16 %v465, %v464
      %470 = vrot.lane.b32.xlu0 %v466, 16
      %v471 = vpop.permute.xlu0 %470
      %472 = vrot.lane.b32.xlu0 %v467, 16
      %v473 = vpop.permute.xlu0 %472
      %474 = vrot.lane.b32.xlu0 %v468, 16
      %v475 = vpop.permute.xlu0 %474
      %476 = vrot.lane.b32.xlu0 %v469, 16
      %v477 = vpop.permute.xlu0 %476
      %v478 = vpack.c.b16 %v292, %v290
      %v479 = vpack.c.b16 %v296, %v294
      %v480 = vpack.c.b16 %v300, %v298
      %v481 = vpack.c.b16 %v436, %v302
      %482 = vrot.lane.b32.xlu0 %v478, 32
      %v483 = vpop.permute.xlu0 %482
      %484 = vrot.lane.b32.xlu0 %v479, 32
      %v485 = vpop.permute.xlu0 %484
      %486 = vrot.lane.b32.xlu0 %v480, 32
      %v487 = vpop.permute.xlu0 %486
      %488 = vrot.lane.b32.xlu0 %v481, 32
      %v489 = vpop.permute.xlu0 %488
      %v490 = vunpack.c.l.b16 %v453
      %v491 = vpack.c.b16 %v460, %v459
      %v492 = vpack.c.b16 %v462, %v461
      %v493 = vpack.c.b16 %v464, %v463
      %v494 = vpack.c.b16 %v490, %v465
      %495 = vrot.lane.b32.xlu0 %v491, 48
      %v496 = vpop.permute.xlu0 %495
      %497 = vrot.lane.b32.xlu0 %v492, 48
      %v498 = vpop.permute.xlu0 %497
      %499 = vrot.lane.b32.xlu0 %v493, 48
      %v500 = vpop.permute.xlu0 %499
      %501 = vrot.lane.b32.xlu0 %v494, 48
      %v502 = vpop.permute.xlu0 %501
      %vm503 = vcmask 130048
      %v506 = vsel %vm503, %v454, %v471
      %v509 = vsel %vm503, %v455, %v473
      %v512 = vsel %vm503, %v456, %v475
      %v515 = vsel %vm503, %v457, %v477
      %vm516 = vcmask 261120
      %v518 = vsel %vm516, %v506, %v483
      %v520 = vsel %vm516, %v509, %v485
      %v522 = vsel %vm516, %v512, %v487
      %v524 = vsel %vm516, %v515, %v489
      %vm525 = vcmask 392192
      %v527 = vsel %vm525, %v518, %v496
      %v529 = vsel %vm525, %v520, %v498
      %v531 = vsel %vm525, %v522, %v500
      %v533 = vsel %vm525, %v524, %v502
      %v534 = vld [vmem:[%s1] sm:$0xf]
      %v535 = vld [vmem:[%s1 + $0x4] sm:$0xf]
      %v536 = vld [vmem:[%s1 + $0x8] sm:$0xf]
      %v537 = vld [vmem:[%s1 + $0xc] sm:$0xf]
      %v538 = vld [vmem:[%s1 + $0x10] sm:$0xf]
      %v539 = vld [vmem:[%s1 + $0x14] sm:$0xf]
      %v540 = vld [vmem:[%s1 + $0x18] sm:$0xf]
      %v541 = vld [vmem:[%s1 + $0x1c] sm:$0xf]
      %v550 = vunpack.c.l.b16 %v534
      %v551 = vunpack.c.l.b16 %v535
      %v552 = vunpack.c.l.b16 %v536
      %v553 = vunpack.c.l.b16 %v537
      %v554 = vunpack.c.l.b16 %v538
      %v555 = vunpack.c.l.b16 %v539
      %v556 = vunpack.c.l.b16 %v540
      %v557 = vunpack.c.l.b16 %v541
      %v558 = vpack.c.b16 %v551, %v550
      %v559 = vpack.c.b16 %v553, %v552
      %v560 = vpack.c.b16 %v555, %v554
      %v561 = vpack.c.b16 %v557, %v556
      %vm566 = vcmask 523264
      %v567 = vsel %vm566, %v527, 0
      %v569 = vsel %vm566, %v529, 0
      %v571 = vsel %vm566, %v531, 0
      %v573 = vsel %vm566, %v533, 0
      %575 = vmatprep.subr.bf16.mxu0 0
      %576 = vmatpush1.bf16.msra.mxu0 0
      %577 = vmatprep.subr.bf16.mxu0 0
      %578 = vmatpush1.bf16.msra.mxu0 0
      %579 = vmatprep.subr.bf16.mxu0 0
      %580 = vmatpush1.bf16.msra.mxu0 0
      %581 = vmatprep.subr.bf16.mxu0 0
      %582 = vmatpush1.bf16.msra.mxu0 0
      %583 = vmatprep.subr.bf16.mxu0 0
      %584 = vmatpush1.bf16.msra.mxu0 %v561
      %585 = vmatprep.subr.bf16.mxu0 0
      %586 = vmatpush1.bf16.msra.mxu0 %v560
      %587 = vmatprep.subr.bf16.mxu0 0
      %588 = vmatpush1.bf16.msra.mxu0 %v559
      %589 = vmatprep.subr.bf16.mxu0 0
      %590 = vmatpush1.bf16.msra.mxu0 %v558
      %591 = vmatprep.subr.bf16.mxu0 0
      %592 = vmatpush2.bf16.msra.mxu0 0
      %593 = vmatprep.subr.bf16.mxu0 0
      %594 = vmatpush2.bf16.msra.mxu0 0
      %595 = vmatprep.subr.bf16.mxu0 0
      %596 = vmatpush2.bf16.msra.mxu0 0
      %597 = vmatprep.subr.bf16.mxu0 0
      %598 = vmatpush2.bf16.msra.mxu0 0
      %599 = vmatprep.subr.bf16.mxu0 0
      %600 = vmatpush2.bf16.msra.mxu0 0
      %601 = vmatprep.subr.bf16.mxu0 0
      %602 = vmatpush2.bf16.msra.mxu0 0
      %603 = vmatprep.subr.bf16.mxu0 0
      %604 = vmatpush2.bf16.msra.mxu0 0
      %605 = vmatprep.subr.bf16.mxu0 0
      %606 = vmatpush2.bf16.msra.mxu0 0
      %607 = vmatprep.mubr.bf16.mxu0 0
      %608 = vmatmul.mubr.bf16.gmra.mxu0 %v567
      %v609 = vpop.f32.mrf.mxu0
      %v610 = vadd.f32 0.0, %v609
      %v611 = vpop.f32.mrf.mxu0
      %v612 = vpop.f32.mrf.mxu0
      %v613 = vadd.f32 0.0, %v612
      %v614 = vpop.f32.mrf.mxu0
      %615 = vmatprep.mubr.bf16.mxu0 0
      %616 = vmatmul.mubr.bf16.gmra.mxu0 %v569
      %v617 = vpop.f32.mrf.mxu0
      %v618 = vadd.f32 0.0, %v617
      %v619 = vpop.f32.mrf.mxu0
      %v620 = vpop.f32.mrf.mxu0
      %v621 = vadd.f32 0.0, %v620
      %v622 = vpop.f32.mrf.mxu0
      %623 = vmatprep.mubr.bf16.mxu0 0
      %624 = vmatmul.mubr.bf16.gmra.mxu0 %v571
      %v625 = vpop.f32.mrf.mxu0
      %v626 = vadd.f32 0.0, %v625
      %v627 = vpop.f32.mrf.mxu0
      %v628 = vpop.f32.mrf.mxu0
      %v629 = vadd.f32 0.0, %v628
      %v630 = vpop.f32.mrf.mxu0
      %631 = vmatprep.mubr.bf16.mxu0 0
      %632 = vmatmul.mubr.bf16.gmra.mxu0 %v573
      %v633 = vpop.f32.mrf.mxu0
      %v634 = vadd.f32 0.0, %v633
      %v635 = vpop.f32.mrf.mxu0
      %v636 = vpop.f32.mrf.mxu0
      %v637 = vadd.f32 0.0, %v636
      %v638 = vpop.f32.mrf.mxu0
      %639 = vdwg.mxu0
      %v640 = vmax.f32 %v610, 0.0
      %v641 = vmax.f32 %v613, 0.0
      %v642 = vmax.f32 %v618, 0.0
      %v643 = vmax.f32 %v621, 0.0
      %v644 = vmax.f32 %v626, 0.0
      %v645 = vmax.f32 %v629, 0.0
      %v646 = vmax.f32 %v634, 0.0
      %v647 = vmax.f32 %v637, 0.0
      %vm648 = vcmask 257024
      %649 = vst.msk [vmem:[#allocation2] sm:$0xf] %vm648, 0
      %vm650 = vcmask 253952
      %651 = vst.msk [vmem:[#allocation2 + $0x4] sm:$0x1] %vm650, 0
      %s652 = scalar_lea.vmem [#allocation2], 72
      %653 = vst.msk [vmem:[%s652] sm:$0xf] %vm648, 0
      %654 = vst.msk [vmem:[%s652 + $0x4] sm:$0x1] %vm650, 0
      %vm655 = vcmask 253952
      %vm656 = vsmask.f32 256
      %vm657 = vmand %vm655, %vm656
      %v658 = vld [vmem:[#allocation2] sm:$0x1]
      %v659 = vsel %vm657, 0, %v658
      %660 = vst [vmem:[#allocation2] sm:$0x1] %v659
      %v661 = vld [vmem:[#allocation2 + $0x8] sm:$0x1]
      %v662 = vsel %vm657, 0, %v661
      %663 = vst [vmem:[#allocation2 + $0x8] sm:$0x1] %v662
      %v664 = vld [vmem:[#allocation2 + $0x10] sm:$0x1]
      %v665 = vsel %vm657, 0, %v664
      %666 = vst [vmem:[#allocation2 + $0x10] sm:$0x1] %v665
      %v667 = vld [vmem:[#allocation2 + $0x18] sm:$0x1]
      %v668 = vsel %vm657, 0, %v667
      %669 = vst [vmem:[#allocation2 + $0x18] sm:$0x1] %v668
      %v670 = vld [vmem:[#allocation2 + $0x20] sm:$0x1]
      %v671 = vsel %vm657, 0, %v670
      %672 = vst [vmem:[#allocation2 + $0x20] sm:$0x1] %v671
      %v673 = vld [vmem:[#allocation2 + $0x28] sm:$0x1]
      %v674 = vsel %vm657, 0, %v673
      %675 = vst [vmem:[#allocation2 + $0x28] sm:$0x1] %v674
      %v676 = vld [vmem:[#allocation2 + $0x30] sm:$0x1]
      %v677 = vsel %vm657, 0, %v676
      %678 = vst [vmem:[#allocation2 + $0x30] sm:$0x1] %v677
      %v679 = vld [vmem:[#allocation2 + $0x38] sm:$0x1]
      %v680 = vsel %vm657, 0, %v679
      %681 = vst [vmem:[#allocation2 + $0x38] sm:$0x1] %v680
      %v682 = vld [vmem:[#allocation2 + $0x40] sm:$0x1]
      %v683 = vsel %vm657, 0, %v682
      %684 = vst [vmem:[#allocation2 + $0x40] sm:$0x1] %v683
      %v685 = vld [vmem:[#allocation2 + $0x48] sm:$0x1]
      %v686 = vsel %vm657, 0, %v685
      %687 = vst [vmem:[#allocation2 + $0x48] sm:$0x1] %v686
      %vm688 = vsmask.f32 7938
      %vm689 = vmand %vm655, %vm688
      %v690 = vld [vmem:[#allocation2 + $0x4] sm:$0x1]
      %v691 = vsel %vm689, 0, %v690
      %692 = vst [vmem:[#allocation2 + $0x4] sm:$0x1] %v691
      %v693 = vld [vmem:[#allocation2 + $0xc] sm:$0x1]
      %v694 = vsel %vm689, 0, %v693
      %695 = vst [vmem:[#allocation2 + $0xc] sm:$0x1] %v694
      %v696 = vld [vmem:[#allocation2 + $0x14] sm:$0x1]
      %v697 = vsel %vm689, 0, %v696
      %698 = vst [vmem:[#allocation2 + $0x14] sm:$0x1] %v697
      %v699 = vld [vmem:[#allocation2 + $0x1c] sm:$0x1]
      %v700 = vsel %vm689, 0, %v699
      %701 = vst [vmem:[#allocation2 + $0x1c] sm:$0x1] %v700
      %v702 = vld [vmem:[#allocation2 + $0x24] sm:$0x1]
      %v703 = vsel %vm689, 0, %v702
      %704 = vst [vmem:[#allocation2 + $0x24] sm:$0x1] %v703
      %v705 = vld [vmem:[#allocation2 + $0x2c] sm:$0x1]
      %v706 = vsel %vm689, 0, %v705
      %707 = vst [vmem:[#allocation2 + $0x2c] sm:$0x1] %v706
      %v708 = vld [vmem:[#allocation2 + $0x34] sm:$0x1]
      %v709 = vsel %vm689, 0, %v708
      %710 = vst [vmem:[#allocation2 + $0x34] sm:$0x1] %v709
      %v711 = vld [vmem:[#allocation2 + $0x3c] sm:$0x1]
      %v712 = vsel %vm689, 0, %v711
      %713 = vst [vmem:[#allocation2 + $0x3c] sm:$0x1] %v712
      %v714 = vld [vmem:[#allocation2 + $0x44] sm:$0x1]
      %v715 = vsel %vm689, 0, %v714
      %716 = vst [vmem:[#allocation2 + $0x44] sm:$0x1] %v715
      %v717 = vld [vmem:[#allocation2 + $0x4c] sm:$0x1]
      %v718 = vsel %vm689, 0, %v717
      %719 = vst [vmem:[#allocation2 + $0x4c] sm:$0x1] %v718
      %v720 = vpack.c.bf16 %v640, %v640
      %v721 = vpack.c.bf16 %v641, %v641
      %v722 = vpack.c.bf16 %v642, %v642
      %v723 = vpack.c.bf16 %v643, %v643
      %v724 = vpack.c.bf16 %v644, %v644
      %v725 = vpack.c.bf16 %v645, %v645
      %v726 = vpack.c.bf16 %v646, %v646
      %v727 = vpack.c.bf16 %v647, %v647
      %v736 = vunpack.c.l.b16 %v720
      %v737 = vunpack.c.l.b16 %v721
      %v738 = vunpack.c.l.b16 %v722
      %v739 = vunpack.c.l.b16 %v723
      %v740 = vunpack.c.l.b16 %v724
      %v741 = vunpack.c.l.b16 %v725
      %v742 = vunpack.c.l.b16 %v726
      %v743 = vunpack.c.l.b16 %v727
      %v744 = vpack.c.b16 %v736, %v736
      %v745 = vpack.c.b16 %v737, %v737
      %v746 = vpack.c.b16 %v738, %v738
      %v747 = vpack.c.b16 %v739, %v739
      %v748 = vpack.c.b16 %v740, %v740
      %v749 = vpack.c.b16 %v741, %v741
      %v750 = vpack.c.b16 %v742, %v742
      %v751 = vpack.c.b16 %v743, %v743
      %v753 = vshrl.u32 %v744, 16
      %v755 = vrot.slane %v753, 7
      %v756 = vshll.u32 %v744, 16
      %v758 = vor.u32 %v755, %v756
      %v759 = vrot.slane %v755, 4
      %v761 = vshrl.u32 %v745, 16
      %v763 = vrot.slane %v761, 7
      %v764 = vshll.u32 %v745, 16
      %v766 = vor.u32 %v763, %v764
      %v767 = vrot.slane %v763, 4
      %v769 = vshrl.u32 %v746, 16
      %v771 = vrot.slane %v769, 7
      %v772 = vshll.u32 %v746, 16
      %v774 = vor.u32 %v771, %v772
      %v775 = vrot.slane %v771, 4
      %v777 = vshrl.u32 %v747, 16
      %v779 = vrot.slane %v777, 7
      %v780 = vshll.u32 %v747, 16
      %v782 = vor.u32 %v779, %v780
      %v783 = vrot.slane %v779, 4
      %v785 = vshrl.u32 %v748, 16
      %v787 = vrot.slane %v785, 7
      %v788 = vshll.u32 %v748, 16
      %v790 = vor.u32 %v787, %v788
      %v791 = vrot.slane %v787, 4
      %v793 = vshrl.u32 %v749, 16
      %v795 = vrot.slane %v793, 7
      %v796 = vshll.u32 %v749, 16
      %v798 = vor.u32 %v795, %v796
      %v799 = vrot.slane %v795, 4
      %v801 = vshrl.u32 %v750, 16
      %v803 = vrot.slane %v801, 7
      %v804 = vshll.u32 %v750, 16
      %v806 = vor.u32 %v803, %v804
      %v807 = vrot.slane %v803, 4
      %v809 = vshrl.u32 %v751, 16
      %v811 = vrot.slane %v809, 7
      %v812 = vshll.u32 %v751, 16
      %v814 = vor.u32 %v811, %v812
      %v815 = vrot.slane %v811, 4
      %s832 = scalar_lea.vmem [#allocation2], 8
      %vm833 = vcmask 257024
      %vm834 = vmand %vm833, %vm688
      %v835 = vld [vmem:[%s832] sm:$0xf]
      %v836 = vsel %vm834, %v758, %v835
      %837 = vst [vmem:[%s832] sm:$0xf] %v836
      %v838 = vld [vmem:[%s832 + $0x4] sm:$0x1]
      %v839 = vsel %vm657, %v759, %v838
      %840 = vst [vmem:[%s832 + $0x4] sm:$0x1] %v839
      %v841 = vld [vmem:[%s832 + $0x8] sm:$0xf]
      %v842 = vsel %vm834, %v766, %v841
      %843 = vst [vmem:[%s832 + $0x8] sm:$0xf] %v842
      %v844 = vld [vmem:[%s832 + $0xc] sm:$0x1]
      %v845 = vsel %vm657, %v767, %v844
      %846 = vst [vmem:[%s832 + $0xc] sm:$0x1] %v845
      %v847 = vld [vmem:[%s832 + $0x10] sm:$0xf]
      %v848 = vsel %vm834, %v774, %v847
      %849 = vst [vmem:[%s832 + $0x10] sm:$0xf] %v848
      %v850 = vld [vmem:[%s832 + $0x14] sm:$0x1]
      %v851 = vsel %vm657, %v775, %v850
      %852 = vst [vmem:[%s832 + $0x14] sm:$0x1] %v851
      %v853 = vld [vmem:[%s832 + $0x18] sm:$0xf]
      %v854 = vsel %vm834, %v782, %v853
      %855 = vst [vmem:[%s832 + $0x18] sm:$0xf] %v854
      %v856 = vld [vmem:[%s832 + $0x1c] sm:$0x1]
      %v857 = vsel %vm657, %v783, %v856
      %858 = vst [vmem:[%s832 + $0x1c] sm:$0x1] %v857
      %v859 = vld [vmem:[%s832 + $0x20] sm:$0xf]
      %v860 = vsel %vm834, %v790, %v859
      %861 = vst [vmem:[%s832 + $0x20] sm:$0xf] %v860
      %v862 = vld [vmem:[%s832 + $0x24] sm:$0x1]
      %v863 = vsel %vm657, %v791, %v862
      %864 = vst [vmem:[%s832 + $0x24] sm:$0x1] %v863
      %v865 = vld [vmem:[%s832 + $0x28] sm:$0xf]
      %v866 = vsel %vm834, %v798, %v865
      %867 = vst [vmem:[%s832 + $0x28] sm:$0xf] %v866
      %v868 = vld [vmem:[%s832 + $0x2c] sm:$0x1]
      %v869 = vsel %vm657, %v799, %v868
      %870 = vst [vmem:[%s832 + $0x2c] sm:$0x1] %v869
      %v871 = vld [vmem:[%s832 + $0x30] sm:$0xf]
      %v872 = vsel %vm834, %v806, %v871
      %873 = vst [vmem:[%s832 + $0x30] sm:$0xf] %v872
      %v874 = vld [vmem:[%s832 + $0x34] sm:$0x1]
      %v875 = vsel %vm657, %v807, %v874
      %876 = vst [vmem:[%s832 + $0x34] sm:$0x1] %v875
      %v877 = vld [vmem:[%s832 + $0x38] sm:$0xf]
      %v878 = vsel %vm834, %v814, %v877
      %879 = vst [vmem:[%s832 + $0x38] sm:$0xf] %v878
      %v880 = vld [vmem:[%s832 + $0x3c] sm:$0x1]
      %v881 = vsel %vm657, %v815, %v880
      %882 = vst [vmem:[%s832 + $0x3c] sm:$0x1] %v881
      %v883 = vld [vmem:[%s3] sm:$0x1]
      %v884 = vld [vmem:[%s832] sm:$0xf]
      %v885 = vld [vmem:[%s832 + $0x4] sm:$0x1]
      %v886 = vld [vmem:[%s832 + $0x8] sm:$0xf]
      %v887 = vld [vmem:[%s832 + $0xc] sm:$0x1]
      %v888 = vld [vmem:[%s832 + $0x10] sm:$0xf]
      %v889 = vld [vmem:[%s832 + $0x14] sm:$0x1]
      %v890 = vld [vmem:[%s832 + $0x18] sm:$0xf]
      %v891 = vld [vmem:[%s832 + $0x1c] sm:$0x1]
      %v892 = vld [vmem:[%s832 + $0x20] sm:$0xf]
      %v893 = vld [vmem:[%s832 + $0x24] sm:$0x1]
      %v894 = vld [vmem:[%s832 + $0x28] sm:$0xf]
      %v895 = vld [vmem:[%s832 + $0x2c] sm:$0x1]
      %v896 = vld [vmem:[%s832 + $0x30] sm:$0xf]
      %v897 = vld [vmem:[%s832 + $0x34] sm:$0x1]
      %v898 = vld [vmem:[%s832 + $0x38] sm:$0xf]
      %v899 = vld [vmem:[%s832 + $0x3c] sm:$0x1]
      %v901 = vshrl.u32 %v884, 16
      %v903 = vrot.slane %v901, 4
      %v904 = vshll.u32 %v884, 16
      %v906 = vrot.slane %v904, 5
      %v907 = vor.u32 %v903, %v906
      %v908 = vrot.slane %v907, 4
      %v910 = vshll.u32 %v885, 16
      %v912 = vrot.slane %v910, 5
      %v913 = vsel %vm322, %v908, %v912
      %v915 = vshrl.u32 %v886, 16
      %v917 = vrot.slane %v915, 4
      %v918 = vshll.u32 %v886, 16
      %v920 = vrot.slane %v918, 5
      %v921 = vor.u32 %v917, %v920
      %v922 = vrot.slane %v921, 4
      %v924 = vshll.u32 %v887, 16
      %v926 = vrot.slane %v924, 5
      %v927 = vsel %vm322, %v922, %v926
      %v929 = vshrl.u32 %v888, 16
      %v931 = vrot.slane %v929, 4
      %v932 = vshll.u32 %v888, 16
      %v934 = vrot.slane %v932, 5
      %v935 = vor.u32 %v931, %v934
      %v936 = vrot.slane %v935, 4
      %v938 = vshll.u32 %v889, 16
      %v940 = vrot.slane %v938, 5
      %v941 = vsel %vm322, %v936, %v940
      %v943 = vshrl.u32 %v890, 16
      %v945 = vrot.slane %v943, 4
      %v946 = vshll.u32 %v890, 16
      %v948 = vrot.slane %v946, 5
      %v949 = vor.u32 %v945, %v948
      %v950 = vrot.slane %v949, 4
      %v952 = vshll.u32 %v891, 16
      %v954 = vrot.slane %v952, 5
      %v955 = vsel %vm322, %v950, %v954
      %v957 = vshrl.u32 %v892, 16
      %v959 = vrot.slane %v957, 4
      %v960 = vshll.u32 %v892, 16
      %v962 = vrot.slane %v960, 5
      %v963 = vor.u32 %v959, %v962
      %v964 = vrot.slane %v963, 4
      %v966 = vshll.u32 %v893, 16
      %v968 = vrot.slane %v966, 5
      %v969 = vsel %vm322, %v964, %v968
      %v971 = vshrl.u32 %v894, 16
      %v973 = vrot.slane %v971, 4
      %v974 = vshll.u32 %v894, 16
      %v976 = vrot.slane %v974, 5
      %v977 = vor.u32 %v973, %v976
      %v978 = vrot.slane %v977, 4
      %v980 = vshll.u32 %v895, 16
      %v982 = vrot.slane %v980, 5
      %v983 = vsel %vm322, %v978, %v982
      %v985 = vshrl.u32 %v896, 16
      %v987 = vrot.slane %v985, 4
      %v988 = vshll.u32 %v896, 16
      %v990 = vrot.slane %v988, 5
      %v991 = vor.u32 %v987, %v990
      %v992 = vrot.slane %v991, 4
      %v994 = vshll.u32 %v897, 16
      %v996 = vrot.slane %v994, 5
      %v997 = vsel %vm322, %v992, %v996
      %v999 = vshrl.u32 %v898, 16
      %v1001 = vrot.slane %v999, 4
      %v1002 = vshll.u32 %v898, 16
      %v1004 = vrot.slane %v1002, 5
      %v1005 = vor.u32 %v1001, %v1004
      %v1006 = vrot.slane %v1005, 4
      %v1008 = vshll.u32 %v899, 16
      %v1010 = vrot.slane %v1008, 5
      %v1011 = vsel %vm322, %v1006, %v1010
      %v1012 = vld [vmem:[#allocation2] sm:$0xf]
      %v1013 = vld [vmem:[#allocation2 + $0x4] sm:$0x1]
      %v1014 = vld [vmem:[#allocation2 + $0x8] sm:$0xf]
      %v1015 = vld [vmem:[#allocation2 + $0xc] sm:$0x1]
      %v1016 = vld [vmem:[#allocation2 + $0x10] sm:$0xf]
      %v1017 = vld [vmem:[#allocation2 + $0x14] sm:$0x1]
      %v1018 = vld [vmem:[#allocation2 + $0x18] sm:$0xf]
      %v1019 = vld [vmem:[#allocation2 + $0x1c] sm:$0x1]
      %v1020 = vld [vmem:[#allocation2 + $0x20] sm:$0xf]
      %v1021 = vld [vmem:[#allocation2 + $0x24] sm:$0x1]
      %v1022 = vld [vmem:[#allocation2 + $0x28] sm:$0xf]
      %v1023 = vld [vmem:[#allocation2 + $0x2c] sm:$0x1]
      %v1024 = vld [vmem:[#allocation2 + $0x30] sm:$0xf]
      %v1025 = vld [vmem:[#allocation2 + $0x34] sm:$0x1]
      %v1026 = vld [vmem:[#allocation2 + $0x38] sm:$0xf]
      %v1027 = vld [vmem:[#allocation2 + $0x3c] sm:$0x1]
      %v1029 = vshrl.u32 %v1012, 16
      %v1031 = vrot.slane %v1029, 4
      %v1032 = vshll.u32 %v1012, 16
      %v1034 = vrot.slane %v1032, 5
      %v1035 = vor.u32 %v1031, %v1034
      %v1036 = vrot.slane %v1035, 4
      %v1038 = vshll.u32 %v1013, 16
      %v1040 = vrot.slane %v1038, 5
      %v1041 = vsel %vm322, %v1036, %v1040
      %v1043 = vshrl.u32 %v1014, 16
      %v1045 = vrot.slane %v1043, 4
      %v1046 = vshll.u32 %v1014, 16
      %v1048 = vrot.slane %v1046, 5
      %v1049 = vor.u32 %v1045, %v1048
      %v1050 = vrot.slane %v1049, 4
      %v1052 = vshll.u32 %v1015, 16
      %v1054 = vrot.slane %v1052, 5
      %v1055 = vsel %vm322, %v1050, %v1054
      %v1057 = vshrl.u32 %v1016, 16
      %v1059 = vrot.slane %v1057, 4
      %v1060 = vshll.u32 %v1016, 16
      %v1062 = vrot.slane %v1060, 5
      %v1063 = vor.u32 %v1059, %v1062
      %v1064 = vrot.slane %v1063, 4
      %v1066 = vshll.u32 %v1017, 16
      %v1068 = vrot.slane %v1066, 5
      %v1069 = vsel %vm322, %v1064, %v1068
      %v1071 = vshrl.u32 %v1018, 16
      %v1073 = vrot.slane %v1071, 4
      %v1074 = vshll.u32 %v1018, 16
      %v1076 = vrot.slane %v1074, 5
      %v1077 = vor.u32 %v1073, %v1076
      %v1078 = vrot.slane %v1077, 4
      %v1080 = vshll.u32 %v1019, 16
      %v1082 = vrot.slane %v1080, 5
      %v1083 = vsel %vm322, %v1078, %v1082
      %v1085 = vshrl.u32 %v1020, 16
      %v1087 = vrot.slane %v1085, 4
      %v1088 = vshll.u32 %v1020, 16
      %v1090 = vrot.slane %v1088, 5
      %v1091 = vor.u32 %v1087, %v1090
      %v1092 = vrot.slane %v1091, 4
      %v1094 = vshll.u32 %v1021, 16
      %v1096 = vrot.slane %v1094, 5
      %v1097 = vsel %vm322, %v1092, %v1096
      %v1099 = vshrl.u32 %v1022, 16
      %v1101 = vrot.slane %v1099, 4
      %v1102 = vshll.u32 %v1022, 16
      %v1104 = vrot.slane %v1102, 5
      %v1105 = vor.u32 %v1101, %v1104
      %v1106 = vrot.slane %v1105, 4
      %v1108 = vshll.u32 %v1023, 16
      %v1110 = vrot.slane %v1108, 5
      %v1111 = vsel %vm322, %v1106, %v1110
      %v1113 = vshrl.u32 %v1024, 16
      %v1115 = vrot.slane %v1113, 4
      %v1116 = vshll.u32 %v1024, 16
      %v1118 = vrot.slane %v1116, 5
      %v1119 = vor.u32 %v1115, %v1118
      %v1120 = vrot.slane %v1119, 4
      %v1122 = vshll.u32 %v1025, 16
      %v1124 = vrot.slane %v1122, 5
      %v1125 = vsel %vm322, %v1120, %v1124
      %v1127 = vshrl.u32 %v1026, 16
      %v1129 = vrot.slane %v1127, 4
      %v1130 = vshll.u32 %v1026, 16
      %v1132 = vrot.slane %v1130, 5
      %v1133 = vor.u32 %v1129, %v1132
      %v1134 = vrot.slane %v1133, 4
      %v1136 = vshll.u32 %v1027, 16
      %v1138 = vrot.slane %v1136, 5
      %v1139 = vsel %vm322, %v1134, %v1138
      %v1140 = vunpack.c.l.b16 %v913
      %v1141 = vunpack.c.l.b16 %v927
      %v1142 = vunpack.c.l.b16 %v941
      %v1143 = vunpack.c.l.b16 %v955
      %v1144 = vunpack.c.l.b16 %v969
      %v1145 = vunpack.c.l.b16 %v983
      %v1146 = vunpack.c.l.b16 %v997
      %v1147 = vunpack.c.l.b16 %v1011
      %v1148 = vpack.c.b16 %v1141, %v1140
      %v1149 = vpack.c.b16 %v1143, %v1142
      %v1150 = vpack.c.b16 %v1145, %v1144
      %v1151 = vpack.c.b16 %v1147, %v1146
      %v1160 = vunpack.c.l.b16 %v884
      %v1161 = vunpack.c.l.b16 %v886
      %v1162 = vunpack.c.l.b16 %v888
      %v1163 = vunpack.c.l.b16 %v890
      %v1164 = vunpack.c.l.b16 %v892
      %v1165 = vunpack.c.l.b16 %v894
      %v1166 = vunpack.c.l.b16 %v896
      %v1167 = vunpack.c.l.b16 %v898
      %v1168 = vpack.c.b16 %v1161, %v1160
      %v1169 = vpack.c.b16 %v1163, %v1162
      %v1170 = vpack.c.b16 %v1165, %v1164
      %v1171 = vpack.c.b16 %v1167, %v1166
      %1172 = vrot.lane.b32.xlu0 %v1168, 32
      %v1173 = vpop.permute.xlu0 %1172
      %1174 = vrot.lane.b32.xlu0 %v1169, 32
      %v1175 = vpop.permute.xlu0 %1174
      %1176 = vrot.lane.b32.xlu0 %v1170, 32
      %v1177 = vpop.permute.xlu0 %1176
      %1178 = vrot.lane.b32.xlu0 %v1171, 32
      %v1179 = vpop.permute.xlu0 %1178
      %v1180 = vunpack.c.l.b16 %v1041
      %v1181 = vunpack.c.l.b16 %v1055
      %v1182 = vunpack.c.l.b16 %v1069
      %v1183 = vunpack.c.l.b16 %v1083
      %v1184 = vunpack.c.l.b16 %v1097
      %v1185 = vunpack.c.l.b16 %v1111
      %v1186 = vunpack.c.l.b16 %v1125
      %v1187 = vunpack.c.l.b16 %v1139
      %v1188 = vpack.c.b16 %v1181, %v1180
      %v1189 = vpack.c.b16 %v1183, %v1182
      %v1190 = vpack.c.b16 %v1185, %v1184
      %v1191 = vpack.c.b16 %v1187, %v1186
      %1192 = vrot.lane.b32.xlu0 %v1188, 64
      %v1193 = vpop.permute.xlu0 %1192
      %1194 = vrot.lane.b32.xlu0 %v1189, 64
      %v1195 = vpop.permute.xlu0 %1194
      %1196 = vrot.lane.b32.xlu0 %v1190, 64
      %v1197 = vpop.permute.xlu0 %1196
      %1198 = vrot.lane.b32.xlu0 %v1191, 64
      %v1199 = vpop.permute.xlu0 %1198
      %v1208 = vunpack.c.l.b16 %v1012
      %v1209 = vunpack.c.l.b16 %v1014
      %v1210 = vunpack.c.l.b16 %v1016
      %v1211 = vunpack.c.l.b16 %v1018
      %v1212 = vunpack.c.l.b16 %v1020
      %v1213 = vunpack.c.l.b16 %v1022
      %v1214 = vunpack.c.l.b16 %v1024
      %v1215 = vunpack.c.l.b16 %v1026
      %v1216 = vpack.c.b16 %v1209, %v1208
      %v1217 = vpack.c.b16 %v1211, %v1210
      %v1218 = vpack.c.b16 %v1213, %v1212
      %v1219 = vpack.c.b16 %v1215, %v1214
      %1220 = vrot.lane.b32.xlu0 %v1216, 96
      %v1221 = vpop.permute.xlu0 %1220
      %1222 = vrot.lane.b32.xlu0 %v1217, 96
      %v1223 = vpop.permute.xlu0 %1222
      %1224 = vrot.lane.b32.xlu0 %v1218, 96
      %v1225 = vpop.permute.xlu0 %1224
      %1226 = vrot.lane.b32.xlu0 %v1219, 96
      %v1227 = vpop.permute.xlu0 %1226
      %v1230 = vsel %vm516, %v1148, %v1173
      %v1233 = vsel %vm516, %v1149, %v1175
      %v1236 = vsel %vm516, %v1150, %v1177
      %v1239 = vsel %vm516, %v1151, %v1179
      %v1241 = vsel %vm566, %v1230, %v1193
      %v1243 = vsel %vm566, %v1233, %v1195
      %v1245 = vsel %vm566, %v1236, %v1197
      %v1247 = vsel %vm566, %v1239, %v1199
      %vm1248 = vcmask 785408
      %v1250 = vsel %vm1248, %v1241, %v1221
      %v1253 = vsel %vm1248, %v1243, %v1223
      %v1256 = vsel %vm1248, %v1245, %v1225
      %v1259 = vsel %vm1248, %v1247, %v1227
      %v1261 = vld [vmem:[%s2] sm:$0xf]
      %v1262 = vld [vmem:[%s2 + $0x4] sm:$0xf]
      %v1263 = vld [vmem:[%s2 + $0x8] sm:$0xf]
      %v1264 = vld [vmem:[%s2 + $0xc] sm:$0xf]
      %v1265 = vld [vmem:[%s2 + $0x10] sm:$0xf]
      %v1266 = vld [vmem:[%s2 + $0x14] sm:$0xf]
      %v1267 = vld [vmem:[%s2 + $0x18] sm:$0xf]
      %v1268 = vld [vmem:[%s2 + $0x1c] sm:$0xf]
      %v1269 = vld [vmem:[%s2 + $0x20] sm:$0xf]
      %v1270 = vld [vmem:[%s2 + $0x24] sm:$0xf]
      %v1271 = vld [vmem:[%s2 + $0x28] sm:$0xf]
      %v1272 = vld [vmem:[%s2 + $0x2c] sm:$0xf]
      %v1273 = vld [vmem:[%s2 + $0x30] sm:$0xf]
      %v1274 = vld [vmem:[%s2 + $0x34] sm:$0xf]
      %v1275 = vld [vmem:[%s2 + $0x38] sm:$0xf]
      %v1276 = vld [vmem:[%s2 + $0x3c] sm:$0xf]
      %v1278 = vlaneseq
      %v1279 = vshrl.u32 %v1278, 7
      %v1280 = vsub.s32 0, %v1279
      %v1281 = vrot.slane %v883, %v1280
      %v1299 = vunpack.c.l.b16 %v1261
      %v1300 = vunpack.c.l.b16 %v1262
      %v1301 = vunpack.c.l.b16 %v1263
      %v1302 = vunpack.c.l.b16 %v1264
      %v1303 = vunpack.c.l.b16 %v1265
      %v1304 = vunpack.c.l.b16 %v1266
      %v1305 = vunpack.c.l.b16 %v1267
      %v1306 = vunpack.c.l.b16 %v1268
      %v1307 = vunpack.c.l.b16 %v1269
      %v1308 = vunpack.c.l.b16 %v1270
      %v1309 = vunpack.c.l.b16 %v1271
      %v1310 = vunpack.c.l.b16 %v1272
      %v1311 = vunpack.c.l.b16 %v1273
      %v1312 = vunpack.c.l.b16 %v1274
      %v1313 = vunpack.c.l.b16 %v1275
      %v1314 = vunpack.c.l.b16 %v1276
      %v1315 = vpack.c.b16 %v1300, %v1299
      %v1316 = vpack.c.b16 %v1302, %v1301
      %v1317 = vpack.c.b16 %v1304, %v1303
      %v1318 = vpack.c.b16 %v1306, %v1305
      %v1319 = vpack.c.b16 %v1308, %v1307
      %v1320 = vpack.c.b16 %v1310, %v1309
      %v1321 = vpack.c.b16 %v1312, %v1311
      %v1322 = vpack.c.b16 %v1314, %v1313
      %1331 = vmatprep.subr.bf16.mxu0 0
      %1332 = vmatpush1.bf16.msra.mxu0 %v1322
      %1333 = vmatprep.subr.bf16.mxu0 0
      %1334 = vmatpush1.bf16.msra.mxu0 %v1321
      %1335 = vmatprep.subr.bf16.mxu0 0
      %1336 = vmatpush1.bf16.msra.mxu0 %v1320
      %1337 = vmatprep.subr.bf16.mxu0 0
      %1338 = vmatpush1.bf16.msra.mxu0 %v1319
      %1339 = vmatprep.subr.bf16.mxu0 0
      %1340 = vmatpush1.bf16.msra.mxu0 %v1318
      %1341 = vmatprep.subr.bf16.mxu0 0
      %1342 = vmatpush1.bf16.msra.mxu0 %v1317
      %1343 = vmatprep.subr.bf16.mxu0 0
      %1344 = vmatpush1.bf16.msra.mxu0 %v1316
      %1345 = vmatprep.subr.bf16.mxu0 0
      %1346 = vmatpush1.bf16.msra.mxu0 %v1315
      %1347 = vmatprep.subr.bf16.mxu0 0
      %1348 = vmatpush2.bf16.msra.mxu0 0
      %1349 = vmatprep.subr.bf16.mxu0 0
      %1350 = vmatpush2.bf16.msra.mxu0 0
      %1351 = vmatprep.subr.bf16.mxu0 0
      %1352 = vmatpush2.bf16.msra.mxu0 0
      %1353 = vmatprep.subr.bf16.mxu0 0
      %1354 = vmatpush2.bf16.msra.mxu0 0
      %1355 = vmatprep.subr.bf16.mxu0 0
      %1356 = vmatpush2.bf16.msra.mxu0 0
      %1357 = vmatprep.subr.bf16.mxu0 0
      %1358 = vmatpush2.bf16.msra.mxu0 0
      %1359 = vmatprep.subr.bf16.mxu0 0
      %1360 = vmatpush2.bf16.msra.mxu0 0
      %1361 = vmatprep.subr.bf16.mxu0 0
      %1362 = vmatpush2.bf16.msra.mxu0 0
      %1363 = vmatprep.mubr.bf16.mxu0 0
      %1364 = vmatmul.mubr.bf16.gmra.mxu0 %v1250
      %v1365 = vpop.f32.mrf.mxu0
      %v1366 = vadd.f32 %v1281, %v1365
      %v1367 = vpop.f32.mrf.mxu0
      %v1368 = vpop.f32.mrf.mxu0
      %v1369 = vadd.f32 %v1281, %v1368
      %v1370 = vpop.f32.mrf.mxu0
      %1371 = vmatprep.mubr.bf16.mxu0 0
      %1372 = vmatmul.mubr.bf16.gmra.mxu0 %v1253
      %v1373 = vpop.f32.mrf.mxu0
      %v1374 = vadd.f32 %v1281, %v1373
      %v1375 = vpop.f32.mrf.mxu0
      %v1376 = vpop.f32.mrf.mxu0
      %v1377 = vadd.f32 %v1281, %v1376
      %v1378 = vpop.f32.mrf.mxu0
      %1379 = vmatprep.mubr.bf16.mxu0 0
      %1380 = vmatmul.mubr.bf16.gmra.mxu0 %v1256
      %v1381 = vpop.f32.mrf.mxu0
      %v1382 = vadd.f32 %v1281, %v1381
      %v1383 = vpop.f32.mrf.mxu0
      %v1384 = vpop.f32.mrf.mxu0
      %v1385 = vadd.f32 %v1281, %v1384
      %v1386 = vpop.f32.mrf.mxu0
      %1387 = vmatprep.mubr.bf16.mxu0 0
      %1388 = vmatmul.mubr.bf16.gmra.mxu0 %v1259
      %v1389 = vpop.f32.mrf.mxu0
      %v1390 = vadd.f32 %v1281, %v1389
      %v1391 = vpop.f32.mrf.mxu0
      %v1392 = vpop.f32.mrf.mxu0
      %v1393 = vadd.f32 %v1281, %v1392
      %v1394 = vpop.f32.mrf.mxu0
      %1395 = vdwg.mxu0
      %vm1396 = vcmask 31744
      %1397 = vst.msk [vmem:[%s197] sm:$0xff] %vm1396, %v1366
      %1398 = vst.msk [vmem:[%s197 + $0x8] sm:$0xff] %vm1396, %v1369
      %1399 = vst.msk [vmem:[%s197 + $0x10] sm:$0xff] %vm1396, %v1374
      %1400 = vst.msk [vmem:[%s197 + $0x18] sm:$0xff] %vm1396, %v1377
      %1401 = vst.msk [vmem:[%s197 + $0x20] sm:$0xff] %vm1396, %v1382
      %1402 = vst.msk [vmem:[%s197 + $0x28] sm:$0xff] %vm1396, %v1385
      %1403 = vst.msk [vmem:[%s197 + $0x30] sm:$0xff] %vm1396, %v1390
      %1404 = vst.msk [vmem:[%s197 + $0x38] sm:$0xff] %vm1396, %v1393
      %v1405 = vld [vmem:[%s832] sm:$0xe]
      %v1406 = vld [vmem:[%s832 + $0x4] sm:$0x1]
      %v1407 = vld [vmem:[%s832 + $0x8] sm:$0xe]
      %v1408 = vld [vmem:[%s832 + $0xc] sm:$0x1]
      %v1409 = vld [vmem:[%s832 + $0x10] sm:$0xe]
      %v1410 = vld [vmem:[%s832 + $0x14] sm:$0x1]
      %v1411 = vld [vmem:[%s832 + $0x18] sm:$0xe]
      %v1412 = vld [vmem:[%s832 + $0x1c] sm:$0x1]
      %v1413 = vld [vmem:[%s832 + $0x20] sm:$0xe]
      %v1414 = vld [vmem:[%s832 + $0x24] sm:$0x1]
      %v1415 = vld [vmem:[%s832 + $0x28] sm:$0xe]
      %v1416 = vld [vmem:[%s832 + $0x2c] sm:$0x1]
      %v1417 = vld [vmem:[%s832 + $0x30] sm:$0xe]
      %v1418 = vld [vmem:[%s832 + $0x34] sm:$0x1]
      %v1419 = vld [vmem:[%s832 + $0x38] sm:$0xe]
      %v1420 = vld [vmem:[%s832 + $0x3c] sm:$0x1]
      %vm1437 = vcmask 1042432
      %vm1438 = vcmask 1046532
      %vm1439 = vmor %vm1437, %vm1438
      %v1440 = vrot.slane %v1405, 5
      %v1441 = vrot.slane %v1440, 4
      %v1442 = vrot.slane %v1406, 5
      %v1443 = vsel %vm1439, %v1441, %v1442
      %v1444 = vrot.slane %v1407, 5
      %v1445 = vrot.slane %v1444, 4
      %v1446 = vrot.slane %v1408, 5
      %v1447 = vsel %vm1439, %v1445, %v1446
      %v1448 = vrot.slane %v1409, 5
      %v1449 = vrot.slane %v1448, 4
      %v1450 = vrot.slane %v1410, 5
      %v1451 = vsel %vm1439, %v1449, %v1450
      %v1452 = vrot.slane %v1411, 5
      %v1453 = vrot.slane %v1452, 4
      %v1454 = vrot.slane %v1412, 5
      %v1455 = vsel %vm1439, %v1453, %v1454
      %v1456 = vrot.slane %v1413, 5
      %v1457 = vrot.slane %v1456, 4
      %v1458 = vrot.slane %v1414, 5
      %v1459 = vsel %vm1439, %v1457, %v1458
      %v1460 = vrot.slane %v1415, 5
      %v1461 = vrot.slane %v1460, 4
      %v1462 = vrot.slane %v1416, 5
      %v1463 = vsel %vm1439, %v1461, %v1462
      %v1464 = vrot.slane %v1417, 5
      %v1465 = vrot.slane %v1464, 4
      %v1466 = vrot.slane %v1418, 5
      %v1467 = vsel %vm1439, %v1465, %v1466
      %v1468 = vrot.slane %v1419, 5
      %v1469 = vrot.slane %v1468, 4
      %v1470 = vrot.slane %v1420, 5
      %v1471 = vsel %vm1439, %v1469, %v1470
      %v1472 = vld [vmem:[%s832] sm:$0xf]
      %v1473 = vld [vmem:[%s832 + $0x8] sm:$0xf]
      %v1474 = vld [vmem:[%s832 + $0x10] sm:$0xf]
      %v1475 = vld [vmem:[%s832 + $0x18] sm:$0xf]
      %v1476 = vld [vmem:[%s832 + $0x20] sm:$0xf]
      %v1477 = vld [vmem:[%s832 + $0x28] sm:$0xf]
      %v1478 = vld [vmem:[%s832 + $0x30] sm:$0xf]
      %v1479 = vld [vmem:[%s832 + $0x38] sm:$0xf]
      %v1481 = vshrl.u32 %v1472, 16
      %v1483 = vrot.slane %v1481, 4
      %v1484 = vshll.u32 %v1472, 16
      %v1486 = vrot.slane %v1484, 5
      %v1487 = vor.u32 %v1483, %v1486
      %v1488 = vrot.slane %v1487, 4
      %v1490 = vshll.u32 %v1406, 16
      %v1492 = vrot.slane %v1490, 5
      %v1493 = vsel %vm322, %v1488, %v1492
      %v1495 = vshrl.u32 %v1473, 16
      %v1497 = vrot.slane %v1495, 4
      %v1498 = vshll.u32 %v1473, 16
      %v1500 = vrot.slane %v1498, 5
      %v1501 = vor.u32 %v1497, %v1500
      %v1502 = vrot.slane %v1501, 4
      %v1504 = vshll.u32 %v1408, 16
      %v1506 = vrot.slane %v1504, 5
      %v1507 = vsel %vm322, %v1502, %v1506
      %v1509 = vshrl.u32 %v1474, 16
      %v1511 = vrot.slane %v1509, 4
      %v1512 = vshll.u32 %v1474, 16
      %v1514 = vrot.slane %v1512, 5
      %v1515 = vor.u32 %v1511, %v1514
      %v1516 = vrot.slane %v1515, 4
      %v1518 = vshll.u32 %v1410, 16
      %v1520 = vrot.slane %v1518, 5
      %v1521 = vsel %vm322, %v1516, %v1520
      %v1523 = vshrl.u32 %v1475, 16
      %v1525 = vrot.slane %v1523, 4
      %v1526 = vshll.u32 %v1475, 16
      %v1528 = vrot.slane %v1526, 5
      %v1529 = vor.u32 %v1525, %v1528
      %v1530 = vrot.slane %v1529, 4
      %v1532 = vshll.u32 %v1412, 16
      %v1534 = vrot.slane %v1532, 5
      %v1535 = vsel %vm322, %v1530, %v1534
      %v1537 = vshrl.u32 %v1476, 16
      %v1539 = vrot.slane %v1537, 4
      %v1540 = vshll.u32 %v1476, 16
      %v1542 = vrot.slane %v1540, 5
      %v1543 = vor.u32 %v1539, %v1542
      %v1544 = vrot.slane %v1543, 4
      %v1546 = vshll.u32 %v1414, 16
      %v1548 = vrot.slane %v1546, 5
      %v1549 = vsel %vm322, %v1544, %v1548
      %v1551 = vshrl.u32 %v1477, 16
      %v1553 = vrot.slane %v1551, 4
      %v1554 = vshll.u32 %v1477, 16
      %v1556 = vrot.slane %v1554, 5
      %v1557 = vor.u32 %v1553, %v1556
      %v1558 = vrot.slane %v1557, 4
      %v1560 = vshll.u32 %v1416, 16
      %v1562 = vrot.slane %v1560, 5
      %v1563 = vsel %vm322, %v1558, %v1562
      %v1565 = vshrl.u32 %v1478, 16
      %v1567 = vrot.slane %v1565, 4
      %v1568 = vshll.u32 %v1478, 16
      %v1570 = vrot.slane %v1568, 5
      %v1571 = vor.u32 %v1567, %v1570
      %v1572 = vrot.slane %v1571, 4
      %v1574 = vshll.u32 %v1418, 16
      %v1576 = vrot.slane %v1574, 5
      %v1577 = vsel %vm322, %v1572, %v1576
      %v1579 = vshrl.u32 %v1479, 16
      %v1581 = vrot.slane %v1579, 4
      %v1582 = vshll.u32 %v1479, 16
      %v1584 = vrot.slane %v1582, 5
      %v1585 = vor.u32 %v1581, %v1584
      %v1586 = vrot.slane %v1585, 4
      %v1588 = vshll.u32 %v1420, 16
      %v1590 = vrot.slane %v1588, 5
      %v1591 = vsel %vm322, %v1586, %v1590
      %v1592 = vld [vmem:[#allocation2] sm:$0xe]
      %v1593 = vld [vmem:[#allocation2 + $0x4] sm:$0x1]
      %v1594 = vld [vmem:[#allocation2 + $0x8] sm:$0xe]
      %v1595 = vld [vmem:[#allocation2 + $0xc] sm:$0x1]
      %v1596 = vld [vmem:[#allocation2 + $0x10] sm:$0xe]
      %v1597 = vld [vmem:[#allocation2 + $0x14] sm:$0x1]
      %v1598 = vld [vmem:[#allocation2 + $0x18] sm:$0xe]
      %v1599 = vld [vmem:[#allocation2 + $0x1c] sm:$0x1]
      %v1600 = vld [vmem:[#allocation2 + $0x20] sm:$0xe]
      %v1601 = vld [vmem:[#allocation2 + $0x24] sm:$0x1]
      %v1602 = vld [vmem:[#allocation2 + $0x28] sm:$0xe]
      %v1603 = vld [vmem:[#allocation2 + $0x2c] sm:$0x1]
      %v1604 = vld [vmem:[#allocation2 + $0x30] sm:$0xe]
      %v1605 = vld [vmem:[#allocation2 + $0x34] sm:$0x1]
      %v1606 = vld [vmem:[#allocation2 + $0x38] sm:$0xe]
      %v1607 = vld [vmem:[#allocation2 + $0x3c] sm:$0x1]
      %v1624 = vrot.slane %v1592, 5
      %v1625 = vrot.slane %v1624, 4
      %v1626 = vrot.slane %v1593, 5
      %v1627 = vsel %vm1439, %v1625, %v1626
      %v1628 = vrot.slane %v1594, 5
      %v1629 = vrot.slane %v1628, 4
      %v1630 = vrot.slane %v1595, 5
      %v1631 = vsel %vm1439, %v1629, %v1630
      %v1632 = vrot.slane %v1596, 5
      %v1633 = vrot.slane %v1632, 4
      %v1634 = vrot.slane %v1597, 5
      %v1635 = vsel %vm1439, %v1633, %v1634
      %v1636 = vrot.slane %v1598, 5
      %v1637 = vrot.slane %v1636, 4
      %v1638 = vrot.slane %v1599, 5
      %v1639 = vsel %vm1439, %v1637, %v1638
      %v1640 = vrot.slane %v1600, 5
      %v1641 = vrot.slane %v1640, 4
      %v1642 = vrot.slane %v1601, 5
      %v1643 = vsel %vm1439, %v1641, %v1642
      %v1644 = vrot.slane %v1602, 5
      %v1645 = vrot.slane %v1644, 4
      %v1646 = vrot.slane %v1603, 5
      %v1647 = vsel %vm1439, %v1645, %v1646
      %v1648 = vrot.slane %v1604, 5
      %v1649 = vrot.slane %v1648, 4
      %v1650 = vrot.slane %v1605, 5
      %v1651 = vsel %vm1439, %v1649, %v1650
      %v1652 = vrot.slane %v1606, 5
      %v1653 = vrot.slane %v1652, 4
      %v1654 = vrot.slane %v1607, 5
      %v1655 = vsel %vm1439, %v1653, %v1654
      %v1656 = vld [vmem:[#allocation2] sm:$0xf]
      %v1657 = vld [vmem:[#allocation2 + $0x8] sm:$0xf]
      %v1658 = vld [vmem:[#allocation2 + $0x10] sm:$0xf]
      %v1659 = vld [vmem:[#allocation2 + $0x18] sm:$0xf]
      %v1660 = vld [vmem:[#allocation2 + $0x20] sm:$0xf]
      %v1661 = vld [vmem:[#allocation2 + $0x28] sm:$0xf]
      %v1662 = vld [vmem:[#allocation2 + $0x30] sm:$0xf]
      %v1663 = vld [vmem:[#allocation2 + $0x38] sm:$0xf]
      %v1665 = vshrl.u32 %v1656, 16
      %v1667 = vrot.slane %v1665, 4
      %v1668 = vshll.u32 %v1656, 16
      %v1670 = vrot.slane %v1668, 5
      %v1671 = vor.u32 %v1667, %v1670
      %v1672 = vrot.slane %v1671, 4
      %v1674 = vshll.u32 %v1593, 16
      %v1676 = vrot.slane %v1674, 5
      %v1677 = vsel %vm322, %v1672, %v1676
      %v1679 = vshrl.u32 %v1657, 16
      %v1681 = vrot.slane %v1679, 4
      %v1682 = vshll.u32 %v1657, 16
      %v1684 = vrot.slane %v1682, 5
      %v1685 = vor.u32 %v1681, %v1684
      %v1686 = vrot.slane %v1685, 4
      %v1688 = vshll.u32 %v1595, 16
      %v1690 = vrot.slane %v1688, 5
      %v1691 = vsel %vm322, %v1686, %v1690
      %v1693 = vshrl.u32 %v1658, 16
      %v1695 = vrot.slane %v1693, 4
      %v1696 = vshll.u32 %v1658, 16
      %v1698 = vrot.slane %v1696, 5
      %v1699 = vor.u32 %v1695, %v1698
      %v1700 = vrot.slane %v1699, 4
      %v1702 = vshll.u32 %v1597, 16
      %v1704 = vrot.slane %v1702, 5
      %v1705 = vsel %vm322, %v1700, %v1704
      %v1707 = vshrl.u32 %v1659, 16
      %v1709 = vrot.slane %v1707, 4
      %v1710 = vshll.u32 %v1659, 16
      %v1712 = vrot.slane %v1710, 5
      %v1713 = vor.u32 %v1709, %v1712
      %v1714 = vrot.slane %v1713, 4
      %v1716 = vshll.u32 %v1599, 16
      %v1718 = vrot.slane %v1716, 5
      %v1719 = vsel %vm322, %v1714, %v1718
      %v1721 = vshrl.u32 %v1660, 16
      %v1723 = vrot.slane %v1721, 4
      %v1724 = vshll.u32 %v1660, 16
      %v1726 = vrot.slane %v1724, 5
      %v1727 = vor.u32 %v1723, %v1726
      %v1728 = vrot.slane %v1727, 4
      %v1730 = vshll.u32 %v1601, 16
      %v1732 = vrot.slane %v1730, 5
      %v1733 = vsel %vm322, %v1728, %v1732
      %v1735 = vshrl.u32 %v1661, 16
      %v1737 = vrot.slane %v1735, 4
      %v1738 = vshll.u32 %v1661, 16
      %v1740 = vrot.slane %v1738, 5
      %v1741 = vor.u32 %v1737, %v1740
      %v1742 = vrot.slane %v1741, 4
      %v1744 = vshll.u32 %v1603, 16
      %v1746 = vrot.slane %v1744, 5
      %v1747 = vsel %vm322, %v1742, %v1746
      %v1749 = vshrl.u32 %v1662, 16
      %v1751 = vrot.slane %v1749, 4
      %v1752 = vshll.u32 %v1662, 16
      %v1754 = vrot.slane %v1752, 5
      %v1755 = vor.u32 %v1751, %v1754
      %v1756 = vrot.slane %v1755, 4
      %v1758 = vshll.u32 %v1605, 16
      %v1760 = vrot.slane %v1758, 5
      %v1761 = vsel %vm322, %v1756, %v1760
      %v1763 = vshrl.u32 %v1663, 16
      %v1765 = vrot.slane %v1763, 4
      %v1766 = vshll.u32 %v1663, 16
      %v1768 = vrot.slane %v1766, 5
      %v1769 = vor.u32 %v1765, %v1768
      %v1770 = vrot.slane %v1769, 4
      %v1772 = vshll.u32 %v1607, 16
      %v1774 = vrot.slane %v1772, 5
      %v1775 = vsel %vm322, %v1770, %v1774
      %v1776 = vunpack.c.l.b16 %v1443
      %v1777 = vunpack.c.l.b16 %v1447
      %v1778 = vunpack.c.l.b16 %v1451
      %v1779 = vunpack.c.l.b16 %v1455
      %v1780 = vunpack.c.l.b16 %v1459
      %v1781 = vunpack.c.l.b16 %v1463
      %v1782 = vunpack.c.l.b16 %v1467
      %v1783 = vunpack.c.l.b16 %v1471
      %v1784 = vpack.c.b16 %v1777, %v1776
      %v1785 = vpack.c.b16 %v1779, %v1778
      %v1786 = vpack.c.b16 %v1781, %v1780
      %v1787 = vpack.c.b16 %v1783, %v1782
      %v1788 = vunpack.c.l.b16 %v1493
      %v1789 = vunpack.c.l.b16 %v1507
      %v1790 = vunpack.c.l.b16 %v1521
      %v1791 = vunpack.c.l.b16 %v1535
      %v1792 = vunpack.c.l.b16 %v1549
      %v1793 = vunpack.c.l.b16 %v1563
      %v1794 = vunpack.c.l.b16 %v1577
      %v1795 = vunpack.c.l.b16 %v1591
      %v1796 = vpack.c.b16 %v1789, %v1788
      %v1797 = vpack.c.b16 %v1791, %v1790
      %v1798 = vpack.c.b16 %v1793, %v1792
      %v1799 = vpack.c.b16 %v1795, %v1794
      %1800 = vrot.lane.b32.xlu0 %v1796, 32
      %v1801 = vpop.permute.xlu0 %1800
      %1802 = vrot.lane.b32.xlu0 %v1797, 32
      %v1803 = vpop.permute.xlu0 %1802
      %1804 = vrot.lane.b32.xlu0 %v1798, 32
      %v1805 = vpop.permute.xlu0 %1804
      %1806 = vrot.lane.b32.xlu0 %v1799, 32
      %v1807 = vpop.permute.xlu0 %1806
      %v1808 = vunpack.c.l.b16 %v1627
      %v1809 = vunpack.c.l.b16 %v1631
      %v1810 = vunpack.c.l.b16 %v1635
      %v1811 = vunpack.c.l.b16 %v1639
      %v1812 = vunpack.c.l.b16 %v1643
      %v1813 = vunpack.c.l.b16 %v1647
      %v1814 = vunpack.c.l.b16 %v1651
      %v1815 = vunpack.c.l.b16 %v1655
      %v1816 = vpack.c.b16 %v1809, %v1808
      %v1817 = vpack.c.b16 %v1811, %v1810
      %v1818 = vpack.c.b16 %v1813, %v1812
      %v1819 = vpack.c.b16 %v1815, %v1814
      %1820 = vrot.lane.b32.xlu0 %v1816, 64
      %v1821 = vpop.permute.xlu0 %1820
      %1822 = vrot.lane.b32.xlu0 %v1817, 64
      %v1823 = vpop.permute.xlu0 %1822
      %1824 = vrot.lane.b32.xlu0 %v1818, 64
      %v1825 = vpop.permute.xlu0 %1824
      %1826 = vrot.lane.b32.xlu0 %v1819, 64
      %v1827 = vpop.permute.xlu0 %1826
      %v1828 = vunpack.c.l.b16 %v1677
      %v1829 = vunpack.c.l.b16 %v1691
      %v1830 = vunpack.c.l.b16 %v1705
      %v1831 = vunpack.c.l.b16 %v1719
      %v1832 = vunpack.c.l.b16 %v1733
      %v1833 = vunpack.c.l.b16 %v1747
      %v1834 = vunpack.c.l.b16 %v1761
      %v1835 = vunpack.c.l.b16 %v1775
      %v1836 = vpack.c.b16 %v1829, %v1828
      %v1837 = vpack.c.b16 %v1831, %v1830
      %v1838 = vpack.c.b16 %v1833, %v1832
      %v1839 = vpack.c.b16 %v1835, %v1834
      %1840 = vrot.lane.b32.xlu0 %v1836, 96
      %v1841 = vpop.permute.xlu0 %1840
      %1842 = vrot.lane.b32.xlu0 %v1837, 96
      %v1843 = vpop.permute.xlu0 %1842
      %1844 = vrot.lane.b32.xlu0 %v1838, 96
      %v1845 = vpop.permute.xlu0 %1844
      %1846 = vrot.lane.b32.xlu0 %v1839, 96
      %v1847 = vpop.permute.xlu0 %1846
      %v1850 = vsel %vm516, %v1784, %v1801
      %v1853 = vsel %vm516, %v1785, %v1803
      %v1856 = vsel %vm516, %v1786, %v1805
      %v1859 = vsel %vm516, %v1787, %v1807
      %v1861 = vsel %vm566, %v1850, %v1821
      %v1863 = vsel %vm566, %v1853, %v1823
      %v1865 = vsel %vm566, %v1856, %v1825
      %v1867 = vsel %vm566, %v1859, %v1827
      %v1869 = vsel %vm1248, %v1861, %v1841
      %v1872 = vsel %vm1248, %v1863, %v1843
      %v1875 = vsel %vm1248, %v1865, %v1845
      %v1878 = vsel %vm1248, %v1867, %v1847
      %s1880 = scalar_lea.vmem %s2, 64
      %v1881 = vld [vmem:[%s1880] sm:$0xf]
      %v1882 = vld [vmem:[%s1880 + $0x4] sm:$0xf]
      %v1883 = vld [vmem:[%s1880 + $0x8] sm:$0xf]
      %v1884 = vld [vmem:[%s1880 + $0xc] sm:$0xf]
      %v1885 = vld [vmem:[%s1880 + $0x10] sm:$0xf]
      %v1886 = vld [vmem:[%s1880 + $0x14] sm:$0xf]
      %v1887 = vld [vmem:[%s1880 + $0x18] sm:$0xf]
      %v1888 = vld [vmem:[%s1880 + $0x1c] sm:$0xf]
      %v1889 = vld [vmem:[%s1880 + $0x20] sm:$0xf]
      %v1890 = vld [vmem:[%s1880 + $0x24] sm:$0xf]
      %v1891 = vld [vmem:[%s1880 + $0x28] sm:$0xf]
      %v1892 = vld [vmem:[%s1880 + $0x2c] sm:$0xf]
      %v1893 = vld [vmem:[%s1880 + $0x30] sm:$0xf]
      %v1894 = vld [vmem:[%s1880 + $0x34] sm:$0xf]
      %v1895 = vld [vmem:[%s1880 + $0x38] sm:$0xf]
      %v1896 = vld [vmem:[%s1880 + $0x3c] sm:$0xf]
      %v1913 = vunpack.c.l.b16 %v1881
      %v1914 = vunpack.c.l.b16 %v1882
      %v1915 = vunpack.c.l.b16 %v1883
      %v1916 = vunpack.c.l.b16 %v1884
      %v1917 = vunpack.c.l.b16 %v1885
      %v1918 = vunpack.c.l.b16 %v1886
      %v1919 = vunpack.c.l.b16 %v1887
      %v1920 = vunpack.c.l.b16 %v1888
      %v1921 = vunpack.c.l.b16 %v1889
      %v1922 = vunpack.c.l.b16 %v1890
      %v1923 = vunpack.c.l.b16 %v1891
      %v1924 = vunpack.c.l.b16 %v1892
      %v1925 = vunpack.c.l.b16 %v1893
      %v1926 = vunpack.c.l.b16 %v1894
      %v1927 = vunpack.c.l.b16 %v1895
      %v1928 = vunpack.c.l.b16 %v1896
      %v1929 = vpack.c.b16 %v1914, %v1913
      %v1930 = vpack.c.b16 %v1916, %v1915
      %v1931 = vpack.c.b16 %v1918, %v1917
      %v1932 = vpack.c.b16 %v1920, %v1919
      %v1933 = vpack.c.b16 %v1922, %v1921
      %v1934 = vpack.c.b16 %v1924, %v1923
      %v1935 = vpack.c.b16 %v1926, %v1925
      %v1936 = vpack.c.b16 %v1928, %v1927
      %1945 = vmatprep.subr.bf16.mxu0 0
      %1946 = vmatpush1.bf16.msra.mxu0 %v1936
      %1947 = vmatprep.subr.bf16.mxu0 0
      %1948 = vmatpush1.bf16.msra.mxu0 %v1935
      %1949 = vmatprep.subr.bf16.mxu0 0
      %1950 = vmatpush1.bf16.msra.mxu0 %v1934
      %1951 = vmatprep.subr.bf16.mxu0 0
      %1952 = vmatpush1.bf16.msra.mxu0 %v1933
      %1953 = vmatprep.subr.bf16.mxu0 0
      %1954 = vmatpush1.bf16.msra.mxu0 %v1932
      %1955 = vmatprep.subr.bf16.mxu0 0
      %1956 = vmatpush1.bf16.msra.mxu0 %v1931
      %1957 = vmatprep.subr.bf16.mxu0 0
      %1958 = vmatpush1.bf16.msra.mxu0 %v1930
      %1959 = vmatprep.subr.bf16.mxu0 0
      %1960 = vmatpush1.bf16.msra.mxu0 %v1929
      %1961 = vmatprep.subr.bf16.mxu0 0
      %1962 = vmatpush2.bf16.msra.mxu0 0
      %1963 = vmatprep.subr.bf16.mxu0 0
      %1964 = vmatpush2.bf16.msra.mxu0 0
      %1965 = vmatprep.subr.bf16.mxu0 0
      %1966 = vmatpush2.bf16.msra.mxu0 0
      %1967 = vmatprep.subr.bf16.mxu0 0
      %1968 = vmatpush2.bf16.msra.mxu0 0
      %1969 = vmatprep.subr.bf16.mxu0 0
      %1970 = vmatpush2.bf16.msra.mxu0 0
      %1971 = vmatprep.subr.bf16.mxu0 0
      %1972 = vmatpush2.bf16.msra.mxu0 0
      %1973 = vmatprep.subr.bf16.mxu0 0
      %1974 = vmatpush2.bf16.msra.mxu0 0
      %1975 = vmatprep.subr.bf16.mxu0 0
      %1976 = vmatpush2.bf16.msra.mxu0 0
      %1977 = vmatprep.mubr.bf16.mxu0 0
      %1978 = vmatmul.mubr.bf16.gmra.mxu0 %v1869
      %v1979 = vpop.f32.mrf.mxu0
      %v1980 = vadd.f32 %v1281, %v1979
      %v1981 = vpop.f32.mrf.mxu0
      %v1982 = vpop.f32.mrf.mxu0
      %v1983 = vadd.f32 %v1281, %v1982
      %v1984 = vpop.f32.mrf.mxu0
      %1985 = vmatprep.mubr.bf16.mxu0 0
      %1986 = vmatmul.mubr.bf16.gmra.mxu0 %v1872
      %v1987 = vpop.f32.mrf.mxu0
      %v1988 = vadd.f32 %v1281, %v1987
      %v1989 = vpop.f32.mrf.mxu0
      %v1990 = vpop.f32.mrf.mxu0
      %v1991 = vadd.f32 %v1281, %v1990
      %v1992 = vpop.f32.mrf.mxu0
      %1993 = vmatprep.mubr.bf16.mxu0 0
      %1994 = vmatmul.mubr.bf16.gmra.mxu0 %v1875
      %v1995 = vpop.f32.mrf.mxu0
      %v1996 = vadd.f32 %v1281, %v1995
      %v1997 = vpop.f32.mrf.mxu0
      %v1998 = vpop.f32.mrf.mxu0
      %v1999 = vadd.f32 %v1281, %v1998
      %v2000 = vpop.f32.mrf.mxu0
      %2001 = vmatprep.mubr.bf16.mxu0 0
      %2002 = vmatmul.mubr.bf16.gmra.mxu0 %v1878
      %v2003 = vpop.f32.mrf.mxu0
      %v2004 = vadd.f32 %v1281, %v2003
      %v2005 = vpop.f32.mrf.mxu0
      %v2006 = vpop.f32.mrf.mxu0
      %v2007 = vadd.f32 %v1281, %v2006
      %v2008 = vpop.f32.mrf.mxu0
      %2009 = vdwg.mxu0
      %s2010 = scalar_lea.vmem %s197, 64
      %2011 = vst.msk [vmem:[%s2010] sm:$0xff] %vm1396, %v1980
      %2012 = vst.msk [vmem:[%s2010 + $0x8] sm:$0xff] %vm1396, %v1983
      %2013 = vst.msk [vmem:[%s2010 + $0x10] sm:$0xff] %vm1396, %v1988
      %2014 = vst.msk [vmem:[%s2010 + $0x18] sm:$0xff] %vm1396, %v1991
      %2015 = vst.msk [vmem:[%s2010 + $0x20] sm:$0xff] %vm1396, %v1996
      %2016 = vst.msk [vmem:[%s2010 + $0x28] sm:$0xff] %vm1396, %v1999
      %2017 = vst.msk [vmem:[%s2010 + $0x30] sm:$0xff] %vm1396, %v2004
      %2018 = vst.msk [vmem:[%s2010 + $0x38] sm:$0xff] %vm1396, %v2007
      %s2019 = scalar_lea.vmem [#allocation2], 16
      %v2020 = vld [vmem:[%s2019] sm:$0xf]
      %v2021 = vld [vmem:[%s2019 + $0x4] sm:$0x1]
      %v2022 = vld [vmem:[%s2019 + $0x8] sm:$0xf]
      %v2023 = vld [vmem:[%s2019 + $0xc] sm:$0x1]
      %v2024 = vld [vmem:[%s2019 + $0x10] sm:$0xf]
      %v2025 = vld [vmem:[%s2019 + $0x14] sm:$0x1]
      %v2026 = vld [vmem:[%s2019 + $0x18] sm:$0xf]
      %v2027 = vld [vmem:[%s2019 + $0x1c] sm:$0x1]
      %v2028 = vld [vmem:[%s2019 + $0x20] sm:$0xf]
      %v2029 = vld [vmem:[%s2019 + $0x24] sm:$0x1]
      %v2030 = vld [vmem:[%s2019 + $0x28] sm:$0xf]
      %v2031 = vld [vmem:[%s2019 + $0x2c] sm:$0x1]
      %v2032 = vld [vmem:[%s2019 + $0x30] sm:$0xf]
      %v2033 = vld [vmem:[%s2019 + $0x34] sm:$0x1]
      %v2034 = vld [vmem:[%s2019 + $0x38] sm:$0xf]
      %v2035 = vld [vmem:[%s2019 + $0x3c] sm:$0x1]
      %v2037 = vshrl.u32 %v2020, 16
      %v2039 = vrot.slane %v2037, 4
      %v2040 = vshll.u32 %v2020, 16
      %v2042 = vrot.slane %v2040, 5
      %v2043 = vor.u32 %v2039, %v2042
      %v2044 = vrot.slane %v2043, 4
      %v2046 = vshll.u32 %v2021, 16
      %v2048 = vrot.slane %v2046, 5
      %v2049 = vsel %vm322, %v2044, %v2048
      %v2051 = vshrl.u32 %v2022, 16
      %v2053 = vrot.slane %v2051, 4
      %v2054 = vshll.u32 %v2022, 16
      %v2056 = vrot.slane %v2054, 5
      %v2057 = vor.u32 %v2053, %v2056
      %v2058 = vrot.slane %v2057, 4
      %v2060 = vshll.u32 %v2023, 16
      %v2062 = vrot.slane %v2060, 5
      %v2063 = vsel %vm322, %v2058, %v2062
      %v2065 = vshrl.u32 %v2024, 16
      %v2067 = vrot.slane %v2065, 4
      %v2068 = vshll.u32 %v2024, 16
      %v2070 = vrot.slane %v2068, 5
      %v2071 = vor.u32 %v2067, %v2070
      %v2072 = vrot.slane %v2071, 4
      %v2074 = vshll.u32 %v2025, 16
      %v2076 = vrot.slane %v2074, 5
      %v2077 = vsel %vm322, %v2072, %v2076
      %v2079 = vshrl.u32 %v2026, 16
      %v2081 = vrot.slane %v2079, 4
      %v2082 = vshll.u32 %v2026, 16
      %v2084 = vrot.slane %v2082, 5
      %v2085 = vor.u32 %v2081, %v2084
      %v2086 = vrot.slane %v2085, 4
      %v2088 = vshll.u32 %v2027, 16
      %v2090 = vrot.slane %v2088, 5
      %v2091 = vsel %vm322, %v2086, %v2090
      %v2093 = vshrl.u32 %v2028, 16
      %v2095 = vrot.slane %v2093, 4
      %v2096 = vshll.u32 %v2028, 16
      %v2098 = vrot.slane %v2096, 5
      %v2099 = vor.u32 %v2095, %v2098
      %v2100 = vrot.slane %v2099, 4
      %v2102 = vshll.u32 %v2029, 16
      %v2104 = vrot.slane %v2102, 5
      %v2105 = vsel %vm322, %v2100, %v2104
      %v2107 = vshrl.u32 %v2030, 16
      %v2109 = vrot.slane %v2107, 4
      %v2110 = vshll.u32 %v2030, 16
      %v2112 = vrot.slane %v2110, 5
      %v2113 = vor.u32 %v2109, %v2112
      %v2114 = vrot.slane %v2113, 4
      %v2116 = vshll.u32 %v2031, 16
      %v2118 = vrot.slane %v2116, 5
      %v2119 = vsel %vm322, %v2114, %v2118
      %v2121 = vshrl.u32 %v2032, 16
      %v2123 = vrot.slane %v2121, 4
      %v2124 = vshll.u32 %v2032, 16
      %v2126 = vrot.slane %v2124, 5
      %v2127 = vor.u32 %v2123, %v2126
      %v2128 = vrot.slane %v2127, 4
      %v2130 = vshll.u32 %v2033, 16
      %v2132 = vrot.slane %v2130, 5
      %v2133 = vsel %vm322, %v2128, %v2132
      %v2135 = vshrl.u32 %v2034, 16
      %v2137 = vrot.slane %v2135, 4
      %v2138 = vshll.u32 %v2034, 16
      %v2140 = vrot.slane %v2138, 5
      %v2141 = vor.u32 %v2137, %v2140
      %v2142 = vrot.slane %v2141, 4
      %v2144 = vshll.u32 %v2035, 16
      %v2146 = vrot.slane %v2144, 5
      %v2147 = vsel %vm322, %v2142, %v2146
      %v2148 = vld [vmem:[%s832] sm:$0xf]
      %v2149 = vld [vmem:[%s832 + $0x4] sm:$0x1]
      %v2150 = vld [vmem:[%s832 + $0x8] sm:$0xf]
      %v2151 = vld [vmem:[%s832 + $0xc] sm:$0x1]
      %v2152 = vld [vmem:[%s832 + $0x10] sm:$0xf]
      %v2153 = vld [vmem:[%s832 + $0x14] sm:$0x1]
      %v2154 = vld [vmem:[%s832 + $0x18] sm:$0xf]
      %v2155 = vld [vmem:[%s832 + $0x1c] sm:$0x1]
      %v2156 = vld [vmem:[%s832 + $0x20] sm:$0xf]
      %v2157 = vld [vmem:[%s832 + $0x24] sm:$0x1]
      %v2158 = vld [vmem:[%s832 + $0x28] sm:$0xf]
      %v2159 = vld [vmem:[%s832 + $0x2c] sm:$0x1]
      %v2160 = vld [vmem:[%s832 + $0x30] sm:$0xf]
      %v2161 = vld [vmem:[%s832 + $0x34] sm:$0x1]
      %v2162 = vld [vmem:[%s832 + $0x38] sm:$0xf]
      %v2163 = vld [vmem:[%s832 + $0x3c] sm:$0x1]
      %v2165 = vshrl.u32 %v2148, 16
      %v2167 = vrot.slane %v2165, 4
      %v2168 = vshll.u32 %v2148, 16
      %v2170 = vrot.slane %v2168, 5
      %v2171 = vor.u32 %v2167, %v2170
      %v2172 = vrot.slane %v2171, 4
      %v2174 = vshll.u32 %v2149, 16
      %v2176 = vrot.slane %v2174, 5
      %v2177 = vsel %vm322, %v2172, %v2176
      %v2179 = vshrl.u32 %v2150, 16
      %v2181 = vrot.slane %v2179, 4
      %v2182 = vshll.u32 %v2150, 16
      %v2184 = vrot.slane %v2182, 5
      %v2185 = vor.u32 %v2181, %v2184
      %v2186 = vrot.slane %v2185, 4
      %v2188 = vshll.u32 %v2151, 16
      %v2190 = vrot.slane %v2188, 5
      %v2191 = vsel %vm322, %v2186, %v2190
      %v2193 = vshrl.u32 %v2152, 16
      %v2195 = vrot.slane %v2193, 4
      %v2196 = vshll.u32 %v2152, 16
      %v2198 = vrot.slane %v2196, 5
      %v2199 = vor.u32 %v2195, %v2198
      %v2200 = vrot.slane %v2199, 4
      %v2202 = vshll.u32 %v2153, 16
      %v2204 = vrot.slane %v2202, 5
      %v2205 = vsel %vm322, %v2200, %v2204
      %v2207 = vshrl.u32 %v2154, 16
      %v2209 = vrot.slane %v2207, 4
      %v2210 = vshll.u32 %v2154, 16
      %v2212 = vrot.slane %v2210, 5
      %v2213 = vor.u32 %v2209, %v2212
      %v2214 = vrot.slane %v2213, 4
      %v2216 = vshll.u32 %v2155, 16
      %v2218 = vrot.slane %v2216, 5
      %v2219 = vsel %vm322, %v2214, %v2218
      %v2221 = vshrl.u32 %v2156, 16
      %v2223 = vrot.slane %v2221, 4
      %v2224 = vshll.u32 %v2156, 16
      %v2226 = vrot.slane %v2224, 5
      %v2227 = vor.u32 %v2223, %v2226
      %v2228 = vrot.slane %v2227, 4
      %v2230 = vshll.u32 %v2157, 16
      %v2232 = vrot.slane %v2230, 5
      %v2233 = vsel %vm322, %v2228, %v2232
      %v2235 = vshrl.u32 %v2158, 16
      %v2237 = vrot.slane %v2235, 4
      %v2238 = vshll.u32 %v2158, 16
      %v2240 = vrot.slane %v2238, 5
      %v2241 = vor.u32 %v2237, %v2240
      %v2242 = vrot.slane %v2241, 4
      %v2244 = vshll.u32 %v2159, 16
      %v2246 = vrot.slane %v2244, 5
      %v2247 = vsel %vm322, %v2242, %v2246
      %v2249 = vshrl.u32 %v2160, 16
      %v2251 = vrot.slane %v2249, 4
      %v2252 = vshll.u32 %v2160, 16
      %v2254 = vrot.slane %v2252, 5
      %v2255 = vor.u32 %v2251, %v2254
      %v2256 = vrot.slane %v2255, 4
      %v2258 = vshll.u32 %v2161, 16
      %v2260 = vrot.slane %v2258, 5
      %v2261 = vsel %vm322, %v2256, %v2260
      %v2263 = vshrl.u32 %v2162, 16
      %v2265 = vrot.slane %v2263, 4
      %v2266 = vshll.u32 %v2162, 16
      %v2268 = vrot.slane %v2266, 5
      %v2269 = vor.u32 %v2265, %v2268
      %v2270 = vrot.slane %v2269, 4
      %v2272 = vshll.u32 %v2163, 16
      %v2274 = vrot.slane %v2272, 5
      %v2275 = vsel %vm322, %v2270, %v2274
      %v2276 = vunpack.c.l.b16 %v2049
      %v2277 = vunpack.c.l.b16 %v2063
      %v2278 = vunpack.c.l.b16 %v2077
      %v2279 = vunpack.c.l.b16 %v2091
      %v2280 = vunpack.c.l.b16 %v2105
      %v2281 = vunpack.c.l.b16 %v2119
      %v2282 = vunpack.c.l.b16 %v2133
      %v2283 = vunpack.c.l.b16 %v2147
      %v2284 = vpack.c.b16 %v2277, %v2276
      %v2285 = vpack.c.b16 %v2279, %v2278
      %v2286 = vpack.c.b16 %v2281, %v2280
      %v2287 = vpack.c.b16 %v2283, %v2282
      %v2296 = vunpack.c.l.b16 %v2020
      %v2297 = vunpack.c.l.b16 %v2022
      %v2298 = vunpack.c.l.b16 %v2024
      %v2299 = vunpack.c.l.b16 %v2026
      %v2300 = vunpack.c.l.b16 %v2028
      %v2301 = vunpack.c.l.b16 %v2030
      %v2302 = vunpack.c.l.b16 %v2032
      %v2303 = vunpack.c.l.b16 %v2034
      %v2304 = vpack.c.b16 %v2297, %v2296
      %v2305 = vpack.c.b16 %v2299, %v2298
      %v2306 = vpack.c.b16 %v2301, %v2300
      %v2307 = vpack.c.b16 %v2303, %v2302
      %2308 = vrot.lane.b32.xlu0 %v2304, 32
      %v2309 = vpop.permute.xlu0 %2308
      %2310 = vrot.lane.b32.xlu0 %v2305, 32
      %v2311 = vpop.permute.xlu0 %2310
      %2312 = vrot.lane.b32.xlu0 %v2306, 32
      %v2313 = vpop.permute.xlu0 %2312
      %2314 = vrot.lane.b32.xlu0 %v2307, 32
      %v2315 = vpop.permute.xlu0 %2314
      %v2316 = vunpack.c.l.b16 %v2177
      %v2317 = vunpack.c.l.b16 %v2191
      %v2318 = vunpack.c.l.b16 %v2205
      %v2319 = vunpack.c.l.b16 %v2219
      %v2320 = vunpack.c.l.b16 %v2233
      %v2321 = vunpack.c.l.b16 %v2247
      %v2322 = vunpack.c.l.b16 %v2261
      %v2323 = vunpack.c.l.b16 %v2275
      %v2324 = vpack.c.b16 %v2317, %v2316
      %v2325 = vpack.c.b16 %v2319, %v2318
      %v2326 = vpack.c.b16 %v2321, %v2320
      %v2327 = vpack.c.b16 %v2323, %v2322
      %2328 = vrot.lane.b32.xlu0 %v2324, 64
      %v2329 = vpop.permute.xlu0 %2328
      %2330 = vrot.lane.b32.xlu0 %v2325, 64
      %v2331 = vpop.permute.xlu0 %2330
      %2332 = vrot.lane.b32.xlu0 %v2326, 64
      %v2333 = vpop.permute.xlu0 %2332
      %2334 = vrot.lane.b32.xlu0 %v2327, 64
      %v2335 = vpop.permute.xlu0 %2334
      %v2344 = vunpack.c.l.b16 %v2148
      %v2345 = vunpack.c.l.b16 %v2150
      %v2346 = vunpack.c.l.b16 %v2152
      %v2347 = vunpack.c.l.b16 %v2154
      %v2348 = vunpack.c.l.b16 %v2156
      %v2349 = vunpack.c.l.b16 %v2158
      %v2350 = vunpack.c.l.b16 %v2160
      %v2351 = vunpack.c.l.b16 %v2162
      %v2352 = vpack.c.b16 %v2345, %v2344
      %v2353 = vpack.c.b16 %v2347, %v2346
      %v2354 = vpack.c.b16 %v2349, %v2348
      %v2355 = vpack.c.b16 %v2351, %v2350
      %2356 = vrot.lane.b32.xlu0 %v2352, 96
      %v2357 = vpop.permute.xlu0 %2356
      %2358 = vrot.lane.b32.xlu0 %v2353, 96
      %v2359 = vpop.permute.xlu0 %2358
      %2360 = vrot.lane.b32.xlu0 %v2354, 96
      %v2361 = vpop.permute.xlu0 %2360
      %2362 = vrot.lane.b32.xlu0 %v2355, 96
      %v2363 = vpop.permute.xlu0 %2362
      %v2366 = vsel %vm516, %v2284, %v2309
      %v2369 = vsel %vm516, %v2285, %v2311
      %v2372 = vsel %vm516, %v2286, %v2313
      %v2375 = vsel %vm516, %v2287, %v2315
      %v2377 = vsel %vm566, %v2366, %v2329
      %v2379 = vsel %vm566, %v2369, %v2331
      %v2381 = vsel %vm566, %v2372, %v2333
      %v2383 = vsel %vm566, %v2375, %v2335
      %v2385 = vsel %vm1248, %v2377, %v2357
      %v2388 = vsel %vm1248, %v2379, %v2359
      %v2391 = vsel %vm1248, %v2381, %v2361
      %v2394 = vsel %vm1248, %v2383, %v2363
      %s2396 = scalar_lea.vmem %s2, 128
      %v2397 = vld [vmem:[%s2396] sm:$0xf]
      %v2398 = vld [vmem:[%s2396 + $0x4] sm:$0xf]
      %v2399 = vld [vmem:[%s2396 + $0x8] sm:$0xf]
      %v2400 = vld [vmem:[%s2396 + $0xc] sm:$0xf]
      %v2401 = vld [vmem:[%s2396 + $0x10] sm:$0xf]
      %v2402 = vld [vmem:[%s2396 + $0x14] sm:$0xf]
      %v2403 = vld [vmem:[%s2396 + $0x18] sm:$0xf]
      %v2404 = vld [vmem:[%s2396 + $0x1c] sm:$0xf]
      %v2405 = vld [vmem:[%s2396 + $0x20] sm:$0xf]
      %v2406 = vld [vmem:[%s2396 + $0x24] sm:$0xf]
      %v2407 = vld [vmem:[%s2396 + $0x28] sm:$0xf]
      %v2408 = vld [vmem:[%s2396 + $0x2c] sm:$0xf]
      %v2409 = vld [vmem:[%s2396 + $0x30] sm:$0xf]
      %v2410 = vld [vmem:[%s2396 + $0x34] sm:$0xf]
      %v2411 = vld [vmem:[%s2396 + $0x38] sm:$0xf]
      %v2412 = vld [vmem:[%s2396 + $0x3c] sm:$0xf]
      %v2429 = vunpack.c.l.b16 %v2397
      %v2430 = vunpack.c.l.b16 %v2398
      %v2431 = vunpack.c.l.b16 %v2399
      %v2432 = vunpack.c.l.b16 %v2400
      %v2433 = vunpack.c.l.b16 %v2401
      %v2434 = vunpack.c.l.b16 %v2402
      %v2435 = vunpack.c.l.b16 %v2403
      %v2436 = vunpack.c.l.b16 %v2404
      %v2437 = vunpack.c.l.b16 %v2405
      %v2438 = vunpack.c.l.b16 %v2406
      %v2439 = vunpack.c.l.b16 %v2407
      %v2440 = vunpack.c.l.b16 %v2408
      %v2441 = vunpack.c.l.b16 %v2409
      %v2442 = vunpack.c.l.b16 %v2410
      %v2443 = vunpack.c.l.b16 %v2411
      %v2444 = vunpack.c.l.b16 %v2412
      %v2445 = vpack.c.b16 %v2430, %v2429
      %v2446 = vpack.c.b16 %v2432, %v2431
      %v2447 = vpack.c.b16 %v2434, %v2433
      %v2448 = vpack.c.b16 %v2436, %v2435
      %v2449 = vpack.c.b16 %v2438, %v2437
      %v2450 = vpack.c.b16 %v2440, %v2439
      %v2451 = vpack.c.b16 %v2442, %v2441
      %v2452 = vpack.c.b16 %v2444, %v2443
      %2461 = vmatprep.subr.bf16.mxu0 0
      %2462 = vmatpush1.bf16.msra.mxu0 %v2452
      %2463 = vmatprep.subr.bf16.mxu0 0
      %2464 = vmatpush1.bf16.msra.mxu0 %v2451
      %2465 = vmatprep.subr.bf16.mxu0 0
      %2466 = vmatpush1.bf16.msra.mxu0 %v2450
      %2467 = vmatprep.subr.bf16.mxu0 0
      %2468 = vmatpush1.bf16.msra.mxu0 %v2449
      %2469 = vmatprep.subr.bf16.mxu0 0
      %2470 = vmatpush1.bf16.msra.mxu0 %v2448
      %2471 = vmatprep.subr.bf16.mxu0 0
      %2472 = vmatpush1.bf16.msra.mxu0 %v2447
      %2473 = vmatprep.subr.bf16.mxu0 0
      %2474 = vmatpush1.bf16.msra.mxu0 %v2446
      %2475 = vmatprep.subr.bf16.mxu0 0
      %2476 = vmatpush1.bf16.msra.mxu0 %v2445
      %2477 = vmatprep.subr.bf16.mxu0 0
      %2478 = vmatpush2.bf16.msra.mxu0 0
      %2479 = vmatprep.subr.bf16.mxu0 0
      %2480 = vmatpush2.bf16.msra.mxu0 0
      %2481 = vmatprep.subr.bf16.mxu0 0
      %2482 = vmatpush2.bf16.msra.mxu0 0
      %2483 = vmatprep.subr.bf16.mxu0 0
      %2484 = vmatpush2.bf16.msra.mxu0 0
      %2485 = vmatprep.subr.bf16.mxu0 0
      %2486 = vmatpush2.bf16.msra.mxu0 0
      %2487 = vmatprep.subr.bf16.mxu0 0
      %2488 = vmatpush2.bf16.msra.mxu0 0
      %2489 = vmatprep.subr.bf16.mxu0 0
      %2490 = vmatpush2.bf16.msra.mxu0 0
      %2491 = vmatprep.subr.bf16.mxu0 0
      %2492 = vmatpush2.bf16.msra.mxu0 0
      %2493 = vmatprep.mubr.bf16.mxu0 0
      %2494 = vmatmul.mubr.bf16.gmra.mxu0 %v2385
      %v2495 = vpop.f32.mrf.mxu0
      %v2496 = vadd.f32 %v1281, %v2495
      %v2497 = vpop.f32.mrf.mxu0
      %v2498 = vpop.f32.mrf.mxu0
      %v2499 = vadd.f32 %v1281, %v2498
      %v2500 = vpop.f32.mrf.mxu0
      %2501 = vmatprep.mubr.bf16.mxu0 0
      %2502 = vmatmul.mubr.bf16.gmra.mxu0 %v2388
      %v2503 = vpop.f32.mrf.mxu0
      %v2504 = vadd.f32 %v1281, %v2503
      %v2505 = vpop.f32.mrf.mxu0
      %v2506 = vpop.f32.mrf.mxu0
      %v2507 = vadd.f32 %v1281, %v2506
      %v2508 = vpop.f32.mrf.mxu0
      %2509 = vmatprep.mubr.bf16.mxu0 0
      %2510 = vmatmul.mubr.bf16.gmra.mxu0 %v2391
      %v2511 = vpop.f32.mrf.mxu0
      %v2512 = vadd.f32 %v1281, %v2511
      %v2513 = vpop.f32.mrf.mxu0
      %v2514 = vpop.f32.mrf.mxu0
      %v2515 = vadd.f32 %v1281, %v2514
      %v2516 = vpop.f32.mrf.mxu0
      %2517 = vmatprep.mubr.bf16.mxu0 0
      %2518 = vmatmul.mubr.bf16.gmra.mxu0 %v2394
      %v2519 = vpop.f32.mrf.mxu0
      %v2520 = vadd.f32 %v1281, %v2519
      %v2521 = vpop.f32.mrf.mxu0
      %v2522 = vpop.f32.mrf.mxu0
      %v2523 = vadd.f32 %v1281, %v2522
      %v2524 = vpop.f32.mrf.mxu0
      %2525 = vdwg.mxu0
      %s2526 = scalar_lea.vmem %s197, 128
      %2527 = vst.msk [vmem:[%s2526] sm:$0xff] %vm1396, %v2496
      %2528 = vst.msk [vmem:[%s2526 + $0x8] sm:$0xff] %vm1396, %v2499
      %2529 = vst.msk [vmem:[%s2526 + $0x10] sm:$0xff] %vm1396, %v2504
      %2530 = vst.msk [vmem:[%s2526 + $0x18] sm:$0xff] %vm1396, %v2507
      %2531 = vst.msk [vmem:[%s2526 + $0x20] sm:$0xff] %vm1396, %v2512
      %2532 = vst.msk [vmem:[%s2526 + $0x28] sm:$0xff] %vm1396, %v2515
      %2533 = vst.msk [vmem:[%s2526 + $0x30] sm:$0xff] %vm1396, %v2520
      %2534 = vst.msk [vmem:[%s2526 + $0x38] sm:$0xff] %vm1396, %v2523
      %v2535 = vld [vmem:[%s2019] sm:$0xe]
      %v2536 = vld [vmem:[%s2019 + $0x4] sm:$0x1]
      %v2537 = vld [vmem:[%s2019 + $0x8] sm:$0xe]
      %v2538 = vld [vmem:[%s2019 + $0xc] sm:$0x1]
      %v2539 = vld [vmem:[%s2019 + $0x10] sm:$0xe]
      %v2540 = vld [vmem:[%s2019 + $0x14] sm:$0x1]
      %v2541 = vld [vmem:[%s2019 + $0x18] sm:$0xe]
      %v2542 = vld [vmem:[%s2019 + $0x1c] sm:$0x1]
      %v2543 = vld [vmem:[%s2019 + $0x20] sm:$0xe]
      %v2544 = vld [vmem:[%s2019 + $0x24] sm:$0x1]
      %v2545 = vld [vmem:[%s2019 + $0x28] sm:$0xe]
      %v2546 = vld [vmem:[%s2019 + $0x2c] sm:$0x1]
      %v2547 = vld [vmem:[%s2019 + $0x30] sm:$0xe]
      %v2548 = vld [vmem:[%s2019 + $0x34] sm:$0x1]
      %v2549 = vld [vmem:[%s2019 + $0x38] sm:$0xe]
      %v2550 = vld [vmem:[%s2019 + $0x3c] sm:$0x1]
      %v2567 = vrot.slane %v2535, 5
      %v2568 = vrot.slane %v2567, 4
      %v2569 = vrot.slane %v2536, 5
      %v2570 = vsel %vm1439, %v2568, %v2569
      %v2571 = vrot.slane %v2537, 5
      %v2572 = vrot.slane %v2571, 4
      %v2573 = vrot.slane %v2538, 5
      %v2574 = vsel %vm1439, %v2572, %v2573
      %v2575 = vrot.slane %v2539, 5
      %v2576 = vrot.slane %v2575, 4
      %v2577 = vrot.slane %v2540, 5
      %v2578 = vsel %vm1439, %v2576, %v2577
      %v2579 = vrot.slane %v2541, 5
      %v2580 = vrot.slane %v2579, 4
      %v2581 = vrot.slane %v2542, 5
      %v2582 = vsel %vm1439, %v2580, %v2581
      %v2583 = vrot.slane %v2543, 5
      %v2584 = vrot.slane %v2583, 4
      %v2585 = vrot.slane %v2544, 5
      %v2586 = vsel %vm1439, %v2584, %v2585
      %v2587 = vrot.slane %v2545, 5
      %v2588 = vrot.slane %v2587, 4
      %v2589 = vrot.slane %v2546, 5
      %v2590 = vsel %vm1439, %v2588, %v2589
      %v2591 = vrot.slane %v2547, 5
      %v2592 = vrot.slane %v2591, 4
      %v2593 = vrot.slane %v2548, 5
      %v2594 = vsel %vm1439, %v2592, %v2593
      %v2595 = vrot.slane %v2549, 5
      %v2596 = vrot.slane %v2595, 4
      %v2597 = vrot.slane %v2550, 5
      %v2598 = vsel %vm1439, %v2596, %v2597
      %v2599 = vld [vmem:[%s2019] sm:$0xf]
      %v2600 = vld [vmem:[%s2019 + $0x8] sm:$0xf]
      %v2601 = vld [vmem:[%s2019 + $0x10] sm:$0xf]
      %v2602 = vld [vmem:[%s2019 + $0x18] sm:$0xf]
      %v2603 = vld [vmem:[%s2019 + $0x20] sm:$0xf]
      %v2604 = vld [vmem:[%s2019 + $0x28] sm:$0xf]
      %v2605 = vld [vmem:[%s2019 + $0x30] sm:$0xf]
      %v2606 = vld [vmem:[%s2019 + $0x38] sm:$0xf]
      %v2608 = vshrl.u32 %v2599, 16
      %v2610 = vrot.slane %v2608, 4
      %v2611 = vshll.u32 %v2599, 16
      %v2613 = vrot.slane %v2611, 5
      %v2614 = vor.u32 %v2610, %v2613
      %v2615 = vrot.slane %v2614, 4
      %v2617 = vshll.u32 %v2536, 16
      %v2619 = vrot.slane %v2617, 5
      %v2620 = vsel %vm322, %v2615, %v2619
      %v2622 = vshrl.u32 %v2600, 16
      %v2624 = vrot.slane %v2622, 4
      %v2625 = vshll.u32 %v2600, 16
      %v2627 = vrot.slane %v2625, 5
      %v2628 = vor.u32 %v2624, %v2627
      %v2629 = vrot.slane %v2628, 4
      %v2631 = vshll.u32 %v2538, 16
      %v2633 = vrot.slane %v2631, 5
      %v2634 = vsel %vm322, %v2629, %v2633
      %v2636 = vshrl.u32 %v2601, 16
      %v2638 = vrot.slane %v2636, 4
      %v2639 = vshll.u32 %v2601, 16
      %v2641 = vrot.slane %v2639, 5
      %v2642 = vor.u32 %v2638, %v2641
      %v2643 = vrot.slane %v2642, 4
      %v2645 = vshll.u32 %v2540, 16
      %v2647 = vrot.slane %v2645, 5
      %v2648 = vsel %vm322, %v2643, %v2647
      %v2650 = vshrl.u32 %v2602, 16
      %v2652 = vrot.slane %v2650, 4
      %v2653 = vshll.u32 %v2602, 16
      %v2655 = vrot.slane %v2653, 5
      %v2656 = vor.u32 %v2652, %v2655
      %v2657 = vrot.slane %v2656, 4
      %v2659 = vshll.u32 %v2542, 16
      %v2661 = vrot.slane %v2659, 5
      %v2662 = vsel %vm322, %v2657, %v2661
      %v2664 = vshrl.u32 %v2603, 16
      %v2666 = vrot.slane %v2664, 4
      %v2667 = vshll.u32 %v2603, 16
      %v2669 = vrot.slane %v2667, 5
      %v2670 = vor.u32 %v2666, %v2669
      %v2671 = vrot.slane %v2670, 4
      %v2673 = vshll.u32 %v2544, 16
      %v2675 = vrot.slane %v2673, 5
      %v2676 = vsel %vm322, %v2671, %v2675
      %v2678 = vshrl.u32 %v2604, 16
      %v2680 = vrot.slane %v2678, 4
      %v2681 = vshll.u32 %v2604, 16
      %v2683 = vrot.slane %v2681, 5
      %v2684 = vor.u32 %v2680, %v2683
      %v2685 = vrot.slane %v2684, 4
      %v2687 = vshll.u32 %v2546, 16
      %v2689 = vrot.slane %v2687, 5
      %v2690 = vsel %vm322, %v2685, %v2689
      %v2692 = vshrl.u32 %v2605, 16
      %v2694 = vrot.slane %v2692, 4
      %v2695 = vshll.u32 %v2605, 16
      %v2697 = vrot.slane %v2695, 5
      %v2698 = vor.u32 %v2694, %v2697
      %v2699 = vrot.slane %v2698, 4
      %v2701 = vshll.u32 %v2548, 16
      %v2703 = vrot.slane %v2701, 5
      %v2704 = vsel %vm322, %v2699, %v2703
      %v2706 = vshrl.u32 %v2606, 16
      %v2708 = vrot.slane %v2706, 4
      %v2709 = vshll.u32 %v2606, 16
      %v2711 = vrot.slane %v2709, 5
      %v2712 = vor.u32 %v2708, %v2711
      %v2713 = vrot.slane %v2712, 4
      %v2715 = vshll.u32 %v2550, 16
      %v2717 = vrot.slane %v2715, 5
      %v2718 = vsel %vm322, %v2713, %v2717
      %v2719 = vld [vmem:[%s832] sm:$0xe]
      %v2720 = vld [vmem:[%s832 + $0x4] sm:$0x1]
      %v2721 = vld [vmem:[%s832 + $0x8] sm:$0xe]
      %v2722 = vld [vmem:[%s832 + $0xc] sm:$0x1]
      %v2723 = vld [vmem:[%s832 + $0x10] sm:$0xe]
      %v2724 = vld [vmem:[%s832 + $0x14] sm:$0x1]
      %v2725 = vld [vmem:[%s832 + $0x18] sm:$0xe]
      %v2726 = vld [vmem:[%s832 + $0x1c] sm:$0x1]
      %v2727 = vld [vmem:[%s832 + $0x20] sm:$0xe]
      %v2728 = vld [vmem:[%s832 + $0x24] sm:$0x1]
      %v2729 = vld [vmem:[%s832 + $0x28] sm:$0xe]
      %v2730 = vld [vmem:[%s832 + $0x2c] sm:$0x1]
      %v2731 = vld [vmem:[%s832 + $0x30] sm:$0xe]
      %v2732 = vld [vmem:[%s832 + $0x34] sm:$0x1]
      %v2733 = vld [vmem:[%s832 + $0x38] sm:$0xe]
      %v2734 = vld [vmem:[%s832 + $0x3c] sm:$0x1]
      %v2751 = vrot.slane %v2719, 5
      %v2752 = vrot.slane %v2751, 4
      %v2753 = vrot.slane %v2720, 5
      %v2754 = vsel %vm1439, %v2752, %v2753
      %v2755 = vrot.slane %v2721, 5
      %v2756 = vrot.slane %v2755, 4
      %v2757 = vrot.slane %v2722, 5
      %v2758 = vsel %vm1439, %v2756, %v2757
      %v2759 = vrot.slane %v2723, 5
      %v2760 = vrot.slane %v2759, 4
      %v2761 = vrot.slane %v2724, 5
      %v2762 = vsel %vm1439, %v2760, %v2761
      %v2763 = vrot.slane %v2725, 5
      %v2764 = vrot.slane %v2763, 4
      %v2765 = vrot.slane %v2726, 5
      %v2766 = vsel %vm1439, %v2764, %v2765
      %v2767 = vrot.slane %v2727, 5
      %v2768 = vrot.slane %v2767, 4
      %v2769 = vrot.slane %v2728, 5
      %v2770 = vsel %vm1439, %v2768, %v2769
      %v2771 = vrot.slane %v2729, 5
      %v2772 = vrot.slane %v2771, 4
      %v2773 = vrot.slane %v2730, 5
      %v2774 = vsel %vm1439, %v2772, %v2773
      %v2775 = vrot.slane %v2731, 5
      %v2776 = vrot.slane %v2775, 4
      %v2777 = vrot.slane %v2732, 5
      %v2778 = vsel %vm1439, %v2776, %v2777
      %v2779 = vrot.slane %v2733, 5
      %v2780 = vrot.slane %v2779, 4
      %v2781 = vrot.slane %v2734, 5
      %v2782 = vsel %vm1439, %v2780, %v2781
      %v2783 = vld [vmem:[%s832] sm:$0xf]
      %v2784 = vld [vmem:[%s832 + $0x8] sm:$0xf]
      %v2785 = vld [vmem:[%s832 + $0x10] sm:$0xf]
      %v2786 = vld [vmem:[%s832 + $0x18] sm:$0xf]
      %v2787 = vld [vmem:[%s832 + $0x20] sm:$0xf]
      %v2788 = vld [vmem:[%s832 + $0x28] sm:$0xf]
      %v2789 = vld [vmem:[%s832 + $0x30] sm:$0xf]
      %v2790 = vld [vmem:[%s832 + $0x38] sm:$0xf]
      %v2792 = vshrl.u32 %v2783, 16
      %v2794 = vrot.slane %v2792, 4
      %v2795 = vshll.u32 %v2783, 16
      %v2797 = vrot.slane %v2795, 5
      %v2798 = vor.u32 %v2794, %v2797
      %v2799 = vrot.slane %v2798, 4
      %v2801 = vshll.u32 %v2720, 16
      %v2803 = vrot.slane %v2801, 5
      %v2804 = vsel %vm322, %v2799, %v2803
      %v2806 = vshrl.u32 %v2784, 16
      %v2808 = vrot.slane %v2806, 4
      %v2809 = vshll.u32 %v2784, 16
      %v2811 = vrot.slane %v2809, 5
      %v2812 = vor.u32 %v2808, %v2811
      %v2813 = vrot.slane %v2812, 4
      %v2815 = vshll.u32 %v2722, 16
      %v2817 = vrot.slane %v2815, 5
      %v2818 = vsel %vm322, %v2813, %v2817
      %v2820 = vshrl.u32 %v2785, 16
      %v2822 = vrot.slane %v2820, 4
      %v2823 = vshll.u32 %v2785, 16
      %v2825 = vrot.slane %v2823, 5
      %v2826 = vor.u32 %v2822, %v2825
      %v2827 = vrot.slane %v2826, 4
      %v2829 = vshll.u32 %v2724, 16
      %v2831 = vrot.slane %v2829, 5
      %v2832 = vsel %vm322, %v2827, %v2831
      %v2834 = vshrl.u32 %v2786, 16
      %v2836 = vrot.slane %v2834, 4
      %v2837 = vshll.u32 %v2786, 16
      %v2839 = vrot.slane %v2837, 5
      %v2840 = vor.u32 %v2836, %v2839
      %v2841 = vrot.slane %v2840, 4
      %v2843 = vshll.u32 %v2726, 16
      %v2845 = vrot.slane %v2843, 5
      %v2846 = vsel %vm322, %v2841, %v2845
      %v2848 = vshrl.u32 %v2787, 16
      %v2850 = vrot.slane %v2848, 4
      %v2851 = vshll.u32 %v2787, 16
      %v2853 = vrot.slane %v2851, 5
      %v2854 = vor.u32 %v2850, %v2853
      %v2855 = vrot.slane %v2854, 4
      %v2857 = vshll.u32 %v2728, 16
      %v2859 = vrot.slane %v2857, 5
      %v2860 = vsel %vm322, %v2855, %v2859
      %v2862 = vshrl.u32 %v2788, 16
      %v2864 = vrot.slane %v2862, 4
      %v2865 = vshll.u32 %v2788, 16
      %v2867 = vrot.slane %v2865, 5
      %v2868 = vor.u32 %v2864, %v2867
      %v2869 = vrot.slane %v2868, 4
      %v2871 = vshll.u32 %v2730, 16
      %v2873 = vrot.slane %v2871, 5
      %v2874 = vsel %vm322, %v2869, %v2873
      %v2876 = vshrl.u32 %v2789, 16
      %v2878 = vrot.slane %v2876, 4
      %v2879 = vshll.u32 %v2789, 16
      %v2881 = vrot.slane %v2879, 5
      %v2882 = vor.u32 %v2878, %v2881
      %v2883 = vrot.slane %v2882, 4
      %v2885 = vshll.u32 %v2732, 16
      %v2887 = vrot.slane %v2885, 5
      %v2888 = vsel %vm322, %v2883, %v2887
      %v2890 = vshrl.u32 %v2790, 16
      %v2892 = vrot.slane %v2890, 4
      %v2893 = vshll.u32 %v2790, 16
      %v2895 = vrot.slane %v2893, 5
      %v2896 = vor.u32 %v2892, %v2895
      %v2897 = vrot.slane %v2896, 4
      %v2899 = vshll.u32 %v2734, 16
      %v2901 = vrot.slane %v2899, 5
      %v2902 = vsel %vm322, %v2897, %v2901
      %v2903 = vunpack.c.l.b16 %v2570
      %v2904 = vunpack.c.l.b16 %v2574
      %v2905 = vunpack.c.l.b16 %v2578
      %v2906 = vunpack.c.l.b16 %v2582
      %v2907 = vunpack.c.l.b16 %v2586
      %v2908 = vunpack.c.l.b16 %v2590
      %v2909 = vunpack.c.l.b16 %v2594
      %v2910 = vunpack.c.l.b16 %v2598
      %v2911 = vpack.c.b16 %v2904, %v2903
      %v2912 = vpack.c.b16 %v2906, %v2905
      %v2913 = vpack.c.b16 %v2908, %v2907
      %v2914 = vpack.c.b16 %v2910, %v2909
      %v2915 = vunpack.c.l.b16 %v2620
      %v2916 = vunpack.c.l.b16 %v2634
      %v2917 = vunpack.c.l.b16 %v2648
      %v2918 = vunpack.c.l.b16 %v2662
      %v2919 = vunpack.c.l.b16 %v2676
      %v2920 = vunpack.c.l.b16 %v2690
      %v2921 = vunpack.c.l.b16 %v2704
      %v2922 = vunpack.c.l.b16 %v2718
      %v2923 = vpack.c.b16 %v2916, %v2915
      %v2924 = vpack.c.b16 %v2918, %v2917
      %v2925 = vpack.c.b16 %v2920, %v2919
      %v2926 = vpack.c.b16 %v2922, %v2921
      %2927 = vrot.lane.b32.xlu0 %v2923, 32
      %v2928 = vpop.permute.xlu0 %2927
      %2929 = vrot.lane.b32.xlu0 %v2924, 32
      %v2930 = vpop.permute.xlu0 %2929
      %2931 = vrot.lane.b32.xlu0 %v2925, 32
      %v2932 = vpop.permute.xlu0 %2931
      %2933 = vrot.lane.b32.xlu0 %v2926, 32
      %v2934 = vpop.permute.xlu0 %2933
      %v2935 = vunpack.c.l.b16 %v2754
      %v2936 = vunpack.c.l.b16 %v2758
      %v2937 = vunpack.c.l.b16 %v2762
      %v2938 = vunpack.c.l.b16 %v2766
      %v2939 = vunpack.c.l.b16 %v2770
      %v2940 = vunpack.c.l.b16 %v2774
      %v2941 = vunpack.c.l.b16 %v2778
      %v2942 = vunpack.c.l.b16 %v2782
      %v2943 = vpack.c.b16 %v2936, %v2935
      %v2944 = vpack.c.b16 %v2938, %v2937
      %v2945 = vpack.c.b16 %v2940, %v2939
      %v2946 = vpack.c.b16 %v2942, %v2941
      %2947 = vrot.lane.b32.xlu0 %v2943, 64
      %v2948 = vpop.permute.xlu0 %2947
      %2949 = vrot.lane.b32.xlu0 %v2944, 64
      %v2950 = vpop.permute.xlu0 %2949
      %2951 = vrot.lane.b32.xlu0 %v2945, 64
      %v2952 = vpop.permute.xlu0 %2951
      %2953 = vrot.lane.b32.xlu0 %v2946, 64
      %v2954 = vpop.permute.xlu0 %2953
      %v2955 = vunpack.c.l.b16 %v2804
      %v2956 = vunpack.c.l.b16 %v2818
      %v2957 = vunpack.c.l.b16 %v2832
      %v2958 = vunpack.c.l.b16 %v2846
      %v2959 = vunpack.c.l.b16 %v2860
      %v2960 = vunpack.c.l.b16 %v2874
      %v2961 = vunpack.c.l.b16 %v2888
      %v2962 = vunpack.c.l.b16 %v2902
      %v2963 = vpack.c.b16 %v2956, %v2955
      %v2964 = vpack.c.b16 %v2958, %v2957
      %v2965 = vpack.c.b16 %v2960, %v2959
      %v2966 = vpack.c.b16 %v2962, %v2961
      %2967 = vrot.lane.b32.xlu0 %v2963, 96
      %v2968 = vpop.permute.xlu0 %2967
      %2969 = vrot.lane.b32.xlu0 %v2964, 96
      %v2970 = vpop.permute.xlu0 %2969
      %2971 = vrot.lane.b32.xlu0 %v2965, 96
      %v2972 = vpop.permute.xlu0 %2971
      %2973 = vrot.lane.b32.xlu0 %v2966, 96
      %v2974 = vpop.permute.xlu0 %2973
      %v2977 = vsel %vm516, %v2911, %v2928
      %v2980 = vsel %vm516, %v2912, %v2930
      %v2983 = vsel %vm516, %v2913, %v2932
      %v2986 = vsel %vm516, %v2914, %v2934
      %v2988 = vsel %vm566, %v2977, %v2948
      %v2990 = vsel %vm566, %v2980, %v2950
      %v2992 = vsel %vm566, %v2983, %v2952
      %v2994 = vsel %vm566, %v2986, %v2954
      %v2996 = vsel %vm1248, %v2988, %v2968
      %v2999 = vsel %vm1248, %v2990, %v2970
      %v3002 = vsel %vm1248, %v2992, %v2972
      %v3005 = vsel %vm1248, %v2994, %v2974
      %s3007 = scalar_lea.vmem %s2, 192
      %v3008 = vld [vmem:[%s3007] sm:$0xf]
      %v3009 = vld [vmem:[%s3007 + $0x4] sm:$0xf]
      %v3010 = vld [vmem:[%s3007 + $0x8] sm:$0xf]
      %v3011 = vld [vmem:[%s3007 + $0xc] sm:$0xf]
      %v3012 = vld [vmem:[%s3007 + $0x10] sm:$0xf]
      %v3013 = vld [vmem:[%s3007 + $0x14] sm:$0xf]
      %v3014 = vld [vmem:[%s3007 + $0x18] sm:$0xf]
      %v3015 = vld [vmem:[%s3007 + $0x1c] sm:$0xf]
      %v3016 = vld [vmem:[%s3007 + $0x20] sm:$0xf]
      %v3017 = vld [vmem:[%s3007 + $0x24] sm:$0xf]
      %v3018 = vld [vmem:[%s3007 + $0x28] sm:$0xf]
      %v3019 = vld [vmem:[%s3007 + $0x2c] sm:$0xf]
      %v3020 = vld [vmem:[%s3007 + $0x30] sm:$0xf]
      %v3021 = vld [vmem:[%s3007 + $0x34] sm:$0xf]
      %v3022 = vld [vmem:[%s3007 + $0x38] sm:$0xf]
      %v3023 = vld [vmem:[%s3007 + $0x3c] sm:$0xf]
      %v3040 = vunpack.c.l.b16 %v3008
      %v3041 = vunpack.c.l.b16 %v3009
      %v3042 = vunpack.c.l.b16 %v3010
      %v3043 = vunpack.c.l.b16 %v3011
      %v3044 = vunpack.c.l.b16 %v3012
      %v3045 = vunpack.c.l.b16 %v3013
      %v3046 = vunpack.c.l.b16 %v3014
      %v3047 = vunpack.c.l.b16 %v3015
      %v3048 = vunpack.c.l.b16 %v3016
      %v3049 = vunpack.c.l.b16 %v3017
      %v3050 = vunpack.c.l.b16 %v3018
      %v3051 = vunpack.c.l.b16 %v3019
      %v3052 = vunpack.c.l.b16 %v3020
      %v3053 = vunpack.c.l.b16 %v3021
      %v3054 = vunpack.c.l.b16 %v3022
      %v3055 = vunpack.c.l.b16 %v3023
      %v3056 = vpack.c.b16 %v3041, %v3040
      %v3057 = vpack.c.b16 %v3043, %v3042
      %v3058 = vpack.c.b16 %v3045, %v3044
      %v3059 = vpack.c.b16 %v3047, %v3046
      %v3060 = vpack.c.b16 %v3049, %v3048
      %v3061 = vpack.c.b16 %v3051, %v3050
      %v3062 = vpack.c.b16 %v3053, %v3052
      %v3063 = vpack.c.b16 %v3055, %v3054
      %3072 = vmatprep.subr.bf16.mxu0 0
      %3073 = vmatpush1.bf16.msra.mxu0 %v3063
      %3074 = vmatprep.subr.bf16.mxu0 0
      %3075 = vmatpush1.bf16.msra.mxu0 %v3062
      %3076 = vmatprep.subr.bf16.mxu0 0
      %3077 = vmatpush1.bf16.msra.mxu0 %v3061
      %3078 = vmatprep.subr.bf16.mxu0 0
      %3079 = vmatpush1.bf16.msra.mxu0 %v3060
      %3080 = vmatprep.subr.bf16.mxu0 0
      %3081 = vmatpush1.bf16.msra.mxu0 %v3059
      %3082 = vmatprep.subr.bf16.mxu0 0
      %3083 = vmatpush1.bf16.msra.mxu0 %v3058
      %3084 = vmatprep.subr.bf16.mxu0 0
      %3085 = vmatpush1.bf16.msra.mxu0 %v3057
      %3086 = vmatprep.subr.bf16.mxu0 0
      %3087 = vmatpush1.bf16.msra.mxu0 %v3056
      %3088 = vmatprep.subr.bf16.mxu0 0
      %3089 = vmatpush2.bf16.msra.mxu0 0
      %3090 = vmatprep.subr.bf16.mxu0 0
      %3091 = vmatpush2.bf16.msra.mxu0 0
      %3092 = vmatprep.subr.bf16.mxu0 0
      %3093 = vmatpush2.bf16.msra.mxu0 0
      %3094 = vmatprep.subr.bf16.mxu0 0
      %3095 = vmatpush2.bf16.msra.mxu0 0
      %3096 = vmatprep.subr.bf16.mxu0 0
      %3097 = vmatpush2.bf16.msra.mxu0 0
      %3098 = vmatprep.subr.bf16.mxu0 0
      %3099 = vmatpush2.bf16.msra.mxu0 0
      %3100 = vmatprep.subr.bf16.mxu0 0
      %3101 = vmatpush2.bf16.msra.mxu0 0
      %3102 = vmatprep.subr.bf16.mxu0 0
      %3103 = vmatpush2.bf16.msra.mxu0 0
      %3104 = vmatprep.mubr.bf16.mxu0 0
      %3105 = vmatmul.mubr.bf16.gmra.mxu0 %v2996
      %v3106 = vpop.f32.mrf.mxu0
      %v3107 = vadd.f32 %v1281, %v3106
      %v3108 = vpop.f32.mrf.mxu0
      %v3109 = vpop.f32.mrf.mxu0
      %v3110 = vadd.f32 %v1281, %v3109
      %v3111 = vpop.f32.mrf.mxu0
      %3112 = vmatprep.mubr.bf16.mxu0 0
      %3113 = vmatmul.mubr.bf16.gmra.mxu0 %v2999
      %v3114 = vpop.f32.mrf.mxu0
      %v3115 = vadd.f32 %v1281, %v3114
      %v3116 = vpop.f32.mrf.mxu0
      %v3117 = vpop.f32.mrf.mxu0
      %v3118 = vadd.f32 %v1281, %v3117
      %v3119 = vpop.f32.mrf.mxu0
      %3120 = vmatprep.mubr.bf16.mxu0 0
      %3121 = vmatmul.mubr.bf16.gmra.mxu0 %v3002
      %v3122 = vpop.f32.mrf.mxu0
      %v3123 = vadd.f32 %v1281, %v3122
      %v3124 = vpop.f32.mrf.mxu0
      %v3125 = vpop.f32.mrf.mxu0
      %v3126 = vadd.f32 %v1281, %v3125
      %v3127 = vpop.f32.mrf.mxu0
      %3128 = vmatprep.mubr.bf16.mxu0 0
      %3129 = vmatmul.mubr.bf16.gmra.mxu0 %v3005
      %v3130 = vpop.f32.mrf.mxu0
      %v3131 = vadd.f32 %v1281, %v3130
      %v3132 = vpop.f32.mrf.mxu0
      %v3133 = vpop.f32.mrf.mxu0
      %v3134 = vadd.f32 %v1281, %v3133
      %v3135 = vpop.f32.mrf.mxu0
      %3136 = vdwg.mxu0
      %s3137 = scalar_lea.vmem %s197, 192
      %3138 = vst.msk [vmem:[%s3137] sm:$0xff] %vm1396, %v3107
      %3139 = vst.msk [vmem:[%s3137 + $0x8] sm:$0xff] %vm1396, %v3110
      %3140 = vst.msk [vmem:[%s3137 + $0x10] sm:$0xff] %vm1396, %v3115
      %3141 = vst.msk [vmem:[%s3137 + $0x18] sm:$0xff] %vm1396, %v3118
      %3142 = vst.msk [vmem:[%s3137 + $0x20] sm:$0xff] %vm1396, %v3123
      %3143 = vst.msk [vmem:[%s3137 + $0x28] sm:$0xff] %vm1396, %v3126
      %3144 = vst.msk [vmem:[%s3137 + $0x30] sm:$0xff] %vm1396, %v3131
      %3145 = vst.msk [vmem:[%s3137 + $0x38] sm:$0xff] %vm1396, %v3134
      %p3146 = scmp.lt.s32.totalorder %s15, 1
      %s3147 = scalar_select %p3146, %s15, 1
      %s3148 = smul.addr %s3147, 32
      %s3149 = smul.addr %s3148, 8
      %s3150 = scalar_lea.vmem %s4, %s3149
      // Predicated region
      $region37: #{unet_skip_block_forward.1} parent=35 // pred_check
        %p3151 = pneg %p122
      $region38: #{unet_skip_block_forward.1} parent=35 // pred_check_branch
        %3153 = sbr.rel (%p3151) target = $region40
      $region39: #{unet_skip_block_forward.1} parent=35 // pred_region
        _
      $region40: #{unet_skip_block_forward.1} parent=35 // pred_fallthru
        _
    $region36: #{unet_skip_block_forward.1} parent=5 // pred_fallthru
      _
    %p3154 = scmp.le.s32.totalorder 2, %s10
    // Predicated region
    $region41: #{unet_skip_block_forward.1} parent=5 // pred_check
      %p3155 = pneg %p3154
    $region42: #{unet_skip_block_forward.1} parent=5 // pred_check_branch
      %3157 = sbr.rel (%p3155) target = $region44
    $region43: #{unet_skip_block_forward.1} parent=5 // pred_region
      %s3158 = ssub.s32 %s10, 2
      // Predicated region
      $region45: #{unet_skip_block_forward.1} parent=43 // pred_check
        %p3159 = pneg %p128
      $region46: #{unet_skip_block_forward.1} parent=43 // pred_check_branch
        %3161 = sbr.rel (%p3159) target = $region48
      $region47: #{unet_skip_block_forward.1} parent=43 // pred_region
        %p3162 = scmp.lt.s32.totalorder %s16, 1
        %s3163 = scalar_select %p3162, %s16, 1
        %s3164 = smul.addr %s3163, 32
        %s3165 = smul.addr %s3164, 8
        %s3166 = scalar_lea.vmem %s4, %s3165
      $region48: #{unet_skip_block_forward.1} parent=43 // pred_fallthru
        _
    $region44: #{unet_skip_block_forward.1} parent=5 // pred_fallthru
      _
  $region6: #{unet_skip_block_forward.1} parent=0 // loop_footer
    %s14 = sadd.s32 1, %s10
  $region7: #{unet_skip_block_forward.1} parent=0 // loop_footer_branch
    %9 = sbr.rel target = $region3
  $region8: #{unet_skip_block_forward.1} parent=0 // loop_exit
    _

</llo_original>
